<compile_context>
chip_gen: v7x
topology: tpu7x:2x2x1
jax: 0.10.0
libtpu: 0.0.40
codegen_flags: <defaults>
</compile_context>

<pallas_src>
import jax
import jax.numpy as jnp
from jax.experimental import pallas as pl
from jax.experimental.pallas import tpu as pltpu


# ----------------------------- tiled linear kernel --------------------------- #
def _linear_kernel(x_ref, w_ref, b_ref, o_ref, acc_ref):
    @pl.when(pl.program_id(2) == 0)
    def _():
        acc_ref[...] = jnp.zeros_like(acc_ref)

    acc_ref[...] += jnp.dot(x_ref[...], w_ref[...],
                            preferred_element_type=jnp.float32)

    @pl.when(pl.program_id(2) == pl.num_programs(2) - 1)
    def _():
        o_ref[...] = acc_ref[...] + b_ref[...]


def linear(x, w, b, *, tm=256, tn=512, tk=512):
    """y = x @ w + b with a (M, N, K) grid and an f32 VMEM accumulator."""
    M, K = x.shape
    N = w.shape[1]
    tm = M if M <= tm else tm
    tn = N if N <= tn else tn
    tk = K if K <= tk else tk
    assert M % tm == 0 and N % tn == 0 and K % tk == 0, "tiles must divide dims"
    return pl.pallas_call(
        _linear_kernel,
        grid=(M // tm, N // tn, K // tk),
        in_specs=[
            pl.BlockSpec((tm, tk), lambda i, j, k: (i, k)),
            pl.BlockSpec((tk, tn), lambda i, j, k: (k, j)),
            pl.BlockSpec((1, tn), lambda i, j, k: (0, j)),
        ],
        out_specs=pl.BlockSpec((tm, tn), lambda i, j, k: (i, j)),
        out_shape=jax.ShapeDtypeStruct((M, N), jnp.float32),
        scratch_shapes=[pltpu.VMEM((tm, tn), jnp.float32)],
        compiler_params=pltpu.CompilerParams(
            dimension_semantics=("parallel", "parallel", "arbitrary")),
    )(x.astype(jnp.float32), w.astype(jnp.float32),
      b.reshape(1, N).astype(jnp.float32))


# --------------------------------- GRU kernel -------------------------------- #
def _gru_kernel(x_ref, h0_ref, wih_ref, whh_ref, bih_ref, bhh_ref, hout_ref):
    """Full GRU layer (all timesteps) in one kernel invocation.

    x_ref:   (B, T, H)   batch-major input
    wih/whh: (H, 3H)     concatenated gate weights (PyTorch gate order r, z, n)
    bih/bhh: (1, 3H)     concatenated gate biases
    hout:    (B, T, H)   batch-major output hidden states
    """
    B, T, H = x_ref.shape

    # Input-gate contributions for every timestep with ONE big matmul
    # (bf16 operands on the MXU, f32 accumulation).
    x2d = x_ref[...].reshape(B * T, H).astype(jnp.bfloat16)
    wih = wih_ref[...].astype(jnp.bfloat16)                      # (H, 3H)
    gx = jnp.dot(x2d, wih, preferred_element_type=jnp.float32) + bih_ref[...]
    gx = gx.reshape(B, T, 3 * H)
    xr = gx[:, :, :H]
    xz = gx[:, :, H:2 * H]
    xn = gx[:, :, 2 * H:]

    # Recurrent weights/bias: cast once, reuse in every unrolled step.
    whh = whh_ref[...].astype(jnp.bfloat16)                      # (H, 3H)
    bhh = bhh_ref[...]                                           # (1, 3H)

    h = h0_ref[...]                                              # (B, H) f32
    # T is small and static -> fully unrolled recurrence; one MXU push per step.
    for t in range(T):
        gh = jnp.dot(h.astype(jnp.bfloat16), whh,
                     preferred_element_type=jnp.float32) + bhh   # (B, 3H)
        r = jax.nn.sigmoid(xr[:, t, :] + gh[:, :H])
        z = jax.nn.sigmoid(xz[:, t, :] + gh[:, H:2 * H])
        n = jnp.tanh(xn[:, t, :] + r * gh[:, 2 * H:])            # PyTorch n-gate
        h = (1.0 - z) * n + z * h
        hout_ref[:, t, :] = h


def gru_layer(x, h0, w_ih, w_hh, b_ih, b_hh):
    """x: (B, T, H) batch-major; h0: (B, H). Returns (B, T, H) hidden states."""
    B, T, H = x.shape
    return pl.pallas_call(
        _gru_kernel,
        out_shape=jax.ShapeDtypeStruct((B, T, H), jnp.float32),
    )(x, h0, w_ih, w_hh, b_ih, b_hh)


# ---------------- fused output projection + cross-entropy kernel ------------- #
def _proj_ce_kernel(y_ref, w_ref, b_ref, tgt_ref, mask_ref, loss_ref,
                    m_scr, l_scr, t_scr):
    j = pl.program_id(1)
    tv = w_ref.shape[1]

    @pl.when(j == 0)
    def _():
        m_scr[...] = jnp.full_like(m_scr, -jnp.inf)
        l_scr[...] = jnp.zeros_like(l_scr)
        t_scr[...] = jnp.zeros_like(t_scr)

    # Logits for this vocab tile only — never written to HBM.
    logits = jnp.dot(y_ref[...], w_ref[...],
                     preferred_element_type=jnp.float32) + b_ref[...]    # (tm, tv)

    # Online log-sum-exp across vocab tiles.
    m_prev = m_scr[...]
    m_new = jnp.maximum(m_prev, jnp.max(logits, axis=-1, keepdims=True))
    l_scr[...] = (l_scr[...] * jnp.exp(m_prev - m_new)
                  + jnp.sum(jnp.exp(logits - m_new), axis=-1, keepdims=True))
    m_scr[...] = m_new

    # Accumulate the target logit (global column index = j*tv + local col).
    cols = jax.lax.broadcasted_iota(jnp.int32, logits.shape, 1) + j * tv
    t_scr[...] += jnp.sum(jnp.where(cols == tgt_ref[...], logits, 0.0),
                          axis=-1, keepdims=True)

    @pl.when(j == pl.num_programs(1) - 1)
    def _():
        # per-token CE (reduction='none'), length-masked; output is only 4*B*T
        # bytes so the (tm, 1) store is negligible after the fusion.
        loss_ref[...] = (m_scr[...] + jnp.log(l_scr[...]) - t_scr[...]) * mask_ref[...]


def fused_proj_ce(y, w, b, targets, mask, *, tm=256, tv=512):
    """loss[i] = CE(softmax(y[i] @ w + b), targets[i]) * mask[i], no HBM logits."""
    M, H = y.shape
    V = w.shape[1]
    tm = M if M <= tm else tm
    tv = V if V <= tv else tv
    assert M % tm == 0 and V % tv == 0, "tiles must divide dims"
    out = pl.pallas_call(
        _proj_ce_kernel,
        grid=(M // tm, V // tv),
        in_specs=[
            pl.BlockSpec((tm, H), lambda i, j: (i, 0)),
            pl.BlockSpec((H, tv), lambda i, j: (0, j)),
            pl.BlockSpec((1, tv), lambda i, j: (0, j)),
            pl.BlockSpec((tm, 1), lambda i, j: (i, 0)),
            pl.BlockSpec((tm, 1), lambda i, j: (i, 0)),
        ],
        out_specs=pl.BlockSpec((tm, 1), lambda i, j: (i, 0)),
        out_shape=jax.ShapeDtypeStruct((M, 1), jnp.float32),
        scratch_shapes=[pltpu.VMEM((tm, 1), jnp.float32)] * 3,
        compiler_params=pltpu.CompilerParams(
            dimension_semantics=("parallel", "arbitrary")),
    )(y.astype(jnp.bfloat16), w.astype(jnp.bfloat16),
      b.reshape(1, V).astype(jnp.float32),
      targets.reshape(M, 1).astype(jnp.int32),
      mask.reshape(M, 1).astype(jnp.float32))
    return out[:, 0]


# ------------------------------ GMM KL kernel -------------------------------- #
def _gmm_kl_kernel(z_ref, mu_ref, logvar_ref, mu_c_ref, inv_ref,
                   sum_lsc_ref, cc_ref, logpi_ref, kl_ref):
    z = z_ref[...]                 # (B, H)
    mu = mu_ref[...]               # (B, H)
    logvar = logvar_ref[...]       # (B, H)
    mu_c = mu_c_ref[...]           # (C, H)
    inv = inv_ref[...]             # (C, H)  1 / sigma_c^2
    sum_lsc = sum_lsc_ref[...]     # (1, C)  sum_d log sigma_c^2
    cc = cc_ref[...]               # (1, C)  sum_d mu_c^2 / sigma_c^2
    logpi = logpi_ref[...]         # (1, C)
    Hd = z.shape[-1]

    def rowdot(a, b):              # contract over H: (M,H)x(C,H) -> (M,C)
        return jax.lax.dot_general(a, b, (((1,), (1,)), ((), ())),
                                   preferred_element_type=jnp.float32)

    mu_c_inv = mu_c * inv

    def quad(x):                   # sum_d (x_d - mu_cd)^2 / sigma_cd^2 -> (B, C)
        return rowdot(x * x, inv) - 2.0 * rowdot(x, mu_c_inv) + cc

    log2pi = jnp.log(2.0 * jnp.pi)
    log_pz_c = -0.5 * (Hd * log2pi + sum_lsc + quad(z))            # (B, C)
    lg = logpi + log_pz_c
    lg = lg - jnp.max(lg, axis=-1, keepdims=True)
    gamma = jnp.exp(lg)
    gamma = gamma / jnp.sum(gamma, axis=-1, keepdims=True)         # q(c|z)

    var = jnp.exp(logvar)                                          # (B, H)
    e_term = 0.5 * (sum_lsc + rowdot(var, inv) + quad(mu))         # (B, C)
    kl = (jnp.sum(gamma * e_term, axis=-1, keepdims=True)
          - 0.5 * jnp.sum(1.0 + logvar, axis=-1, keepdims=True)
          + jnp.sum(gamma * (jnp.log(gamma + 1e-10) - logpi), axis=-1, keepdims=True))
    kl_ref[...] = kl


def gmm_kl(z, mu, logvar, mu_c, logsig_c, log_pi):
    B = z.shape[0]
    C = mu_c.shape[0]
    # Parameter-only reductions done once outside the kernel -> no 1-row matmuls
    # through the MXU inside the kernel.
    inv_c = jnp.exp(-logsig_c)                                     # (C, H)
    sum_lsc = jnp.sum(logsig_c, axis=-1)[None, :]                  # (1, C)
    cc = jnp.sum(mu_c * mu_c * inv_c, axis=-1)[None, :]            # (1, C)
    return pl.pallas_call(
        _gmm_kl_kernel,
        out_shape=jax.ShapeDtypeStruct((B, 1), jnp.float32),
    )(z, mu, logvar, mu_c, inv_c, sum_lsc, cc, log_pi.reshape(1, C))[:, 0]


# ------------------------------ GM-VSAE forward ------------------------------ #
def gmvsae_forward(params, src, trg, src_lengths, trg_lengths, eps, train=True):
    emb = params["embedding"]
    B, _ = src.shape
    _, Tt = trg.shape
    H = emb.shape[1]

    # ---- encoder -------------------------------------------------------------
    x = jnp.take(emb, src, axis=0)                                 # (B, Ts, H)
    h0 = jnp.zeros((B, H), jnp.float32)
    for lp in params["enc"]:
        x = gru_layer(x, h0, lp["w_ih"], lp["w_hh"], lp["b_ih"], lp["b_hh"])
    # pack_padded_sequence semantics: final hidden state at position length-1
    h_enc = jnp.take_along_axis(x, (src_lengths - 1)[:, None, None], axis=1)[:, 0, :]

    # ---- fused fc_mu | fc_logvar (single (H, 2H) projection) ------------------
    mulv = linear(h_enc, params["w_mulv"], params["b_mulv"])       # (B, 2H)
    mu, logvar = mulv[:, :H], mulv[:, H:]
    z = mu + jnp.exp(0.5 * logvar) * eps if train else mu

    # ---- decoder (teacher forcing on trg; z as initial hidden of every layer) -
    y = jnp.take(emb, trg, axis=0)                                 # (B, Tt, H)
    for lp in params["dec"]:
        y = gru_layer(y, z, lp["w_ih"], lp["w_hh"], lp["b_ih"], lp["b_hh"])

    # ---- fused output projection + masked CE (no logits in HBM) ---------------
    mask = (jnp.arange(Tt)[None, :] < trg_lengths[:, None]).astype(jnp.float32)
    tok_loss = fused_proj_ce(y.reshape(B * Tt, H), params["w_out"], params["b_out"],
                             trg.reshape(-1), mask.reshape(-1)).reshape(B, Tt)
    recon = jnp.sum(tok_loss, axis=1) / trg_lengths.astype(jnp.float32)   # (B,)

    # ---- Gaussian-mixture KL --------------------------------------------------
    kl = gmm_kl(z, mu, logvar, params["mu_c"], params["logsig_c"], params["log_pi"])

    # TODO(synk): eval-mode per-cluster anomaly-score path (c != -1) of the original
    # repo is not reproduced; both branches of Model.forward return the loss.
    return jnp.mean(recon + kl)


# ----------------------------- parameter init -------------------------------- #
def init_params(key, label_num, hidden_size, layer_num, n_cluster):
    V, H, L, C = label_num, hidden_size, layer_num, n_cluster
    keys = iter(jax.random.split(key, 64))

    def u(shape, fan):
        bound = 1.0 / (fan ** 0.5)
        return jax.random.uniform(next(keys), shape, jnp.float32, -bound, bound)

    def gru_params():
        # concatenated gate layout along the last axis: [r | z | n] (PyTorch order)
        return dict(w_ih=u((H, 3 * H), H), w_hh=u((H, 3 * H), H),
                    b_ih=u((1, 3 * H), H), b_hh=u((1, 3 * H), H))

    params = {"embedding": jax.random.normal(next(keys), (V, H), jnp.float32) * 0.1}
    params["enc"] = [gru_params() for _ in range(L)]
    params["dec"] = [gru_params() for _ in range(L)]
    params["w_mulv"] = u((H, 2 * H), H)
    params["b_mulv"] = u((2 * H,), H)
    params["w_out"] = u((H, V), H)
    params["b_out"] = u((V,), H)
    params["mu_c"] = jax.random.normal(next(keys), (C, H), jnp.float32) * 0.5
    params["logsig_c"] = jnp.zeros((C, H), jnp.float32)
    params["log_pi"] = jnp.log(jnp.ones((C,), jnp.float32) / C)
    return params


# ----------------------------------- main ------------------------------------ #
if __name__ == "__main__":
    label_num, hidden_size, layer_num, n_cluster = 32, 32, 2, 10
    B, T = 2, 8

    key = jax.random.PRNGKey(0)
    kp, ks, kt, ke = jax.random.split(key, 4)
    params = init_params(kp, label_num, hidden_size, layer_num, n_cluster)

    src = jax.random.randint(ks, (B, T), 0, label_num, dtype=jnp.int32)
    trg = jax.random.randint(kt, (B, T), 0, label_num, dtype=jnp.int32)
    src_lengths = jnp.array([T, T - 2], dtype=jnp.int32)
    trg_lengths = jnp.array([T, T - 3], dtype=jnp.int32)
    eps = jax.random.normal(ke, (B, hidden_size), jnp.float32)

    forward = jax.jit(gmvsae_forward, static_argnames=("train",))
    loss = forward(params, src, trg, src_lengths, trg_lengths, eps, train=True)
    loss = jax.block_until_ready(loss)
    assert bool(jnp.isfinite(loss)), "loss is not finite"
    print("KERNEL_OK")
</pallas_src>

<mosaic_0001>
module attributes {stable_mosaic.version = 11 : i64} {
  func.func @_gru_kernel(%arg0: memref<2x8x32xf32, #tpu.memory_space<vmem>>, %arg1: memref<2x32xf32, #tpu.memory_space<vmem>>, %arg2: memref<32x96xf32, #tpu.memory_space<vmem>>, %arg3: memref<32x96xf32, #tpu.memory_space<vmem>>, %arg4: memref<1x96xf32, #tpu.memory_space<vmem>>, %arg5: memref<1x96xf32, #tpu.memory_space<vmem>>, %arg6: memref<2x8x32xf32, #tpu.memory_space<vmem>>) attributes {dimension_semantics = [], scalar_prefetch = 0 : i64, scratch_operands = 0 : i64, tpu.core_type = #tpu.core_type<tc>} {
    %c0 = arith.constant 0 : index
    %c0_0 = arith.constant 0 : index
    %c0_1 = arith.constant 0 : index
    %0 = vector.load %arg0[%c0, %c0_0, %c0_1] : memref<2x8x32xf32, #tpu.memory_space<vmem>>, vector<2x8x32xf32>
    %1 = vector.shape_cast %0 : vector<2x8x32xf32> to vector<16x32xf32>
    %2 = arith.truncf %1 : vector<16x32xf32> to vector<16x32xbf16>
    %c0_2 = arith.constant 0 : index
    %c0_3 = arith.constant 0 : index
    %3 = vector.load %arg2[%c0_2, %c0_3] : memref<32x96xf32, #tpu.memory_space<vmem>>, vector<32x96xf32>
    %4 = arith.truncf %3 : vector<32x96xf32> to vector<32x96xbf16>
    %cst = arith.constant dense<0.000000e+00> : vector<16x96xf32>
    %5 = tpu.matmul %2, %4, %cst {dimension_numbers = #tpu.dot_dimension_numbers<[1], [0], [0], [1], [0, 0, 1, 1], [], []>} : vector<16x32xbf16>, vector<32x96xbf16>, vector<16x96xf32> -> vector<16x96xf32>
    %c0_4 = arith.constant 0 : index
    %c0_5 = arith.constant 0 : index
    %6 = vector.load %arg4[%c0_4, %c0_5] : memref<1x96xf32, #tpu.memory_space<vmem>>, vector<1x96xf32>
    %7 = vector.broadcast %6 : vector<1x96xf32> to vector<16x96xf32>
    %8 = arith.addf %5, %7 : vector<16x96xf32>
    %9 = vector.shape_cast %8 : vector<16x96xf32> to vector<2x8x96xf32>
    %10 = vector.extract_strided_slice %9 {offsets = [0, 0, 0], sizes = [2, 8, 32], strides = [1, 1, 1]} : vector<2x8x96xf32> to vector<2x8x32xf32>
    %11 = vector.extract_strided_slice %9 {offsets = [0, 0, 32], sizes = [2, 8, 32], strides = [1, 1, 1]} : vector<2x8x96xf32> to vector<2x8x32xf32>
    %12 = vector.extract_strided_slice %9 {offsets = [0, 0, 64], sizes = [2, 8, 32], strides = [1, 1, 1]} : vector<2x8x96xf32> to vector<2x8x32xf32>
    %c0_6 = arith.constant 0 : index
    %c0_7 = arith.constant 0 : index
    %13 = vector.load %arg3[%c0_6, %c0_7] : memref<32x96xf32, #tpu.memory_space<vmem>>, vector<32x96xf32>
    %14 = arith.truncf %13 : vector<32x96xf32> to vector<32x96xbf16>
    %c0_8 = arith.constant 0 : index
    %c0_9 = arith.constant 0 : index
    %15 = vector.load %arg5[%c0_8, %c0_9] : memref<1x96xf32, #tpu.memory_space<vmem>>, vector<1x96xf32>
    %c0_10 = arith.constant 0 : index
    %c0_11 = arith.constant 0 : index
    %16 = vector.load %arg1[%c0_10, %c0_11] : memref<2x32xf32, #tpu.memory_space<vmem>>, vector<2x32xf32>
    %17 = arith.truncf %16 : vector<2x32xf32> to vector<2x32xbf16>
    %cst_12 = arith.constant dense<0.000000e+00> : vector<2x96xf32>
    %18 = tpu.matmul %17, %14, %cst_12 {dimension_numbers = #tpu.dot_dimension_numbers<[1], [0], [0], [1], [0, 0, 1, 1], [], []>} : vector<2x32xbf16>, vector<32x96xbf16>, vector<2x96xf32> -> vector<2x96xf32>
    %19 = vector.broadcast %15 : vector<1x96xf32> to vector<2x96xf32>
    %20 = arith.addf %18, %19 : vector<2x96xf32>
    %21 = vector.extract_strided_slice %10 {offsets = [0, 0, 0], sizes = [2, 1, 32], strides = [1, 1, 1]} : vector<2x8x32xf32> to vector<2x1x32xf32>
    %22 = vector.shape_cast %21 : vector<2x1x32xf32> to vector<2x32xf32>
    %23 = vector.extract_strided_slice %20 {offsets = [0, 0], sizes = [2, 32], strides = [1, 1]} : vector<2x96xf32> to vector<2x32xf32>
    %24 = arith.addf %22, %23 : vector<2x32xf32>
    %25 = arith.negf %24 : vector<2x32xf32>
    %26 = math.exp %25 : vector<2x32xf32>
    %cst_13 = arith.constant 1.000000e+00 : f32
    %27 = vector.broadcast %cst_13 : f32 to vector<2x32xf32>
    %28 = arith.addf %27, %26 : vector<2x32xf32>
    %29 = arith.divf %27, %28 : vector<2x32xf32>
    %30 = vector.extract_strided_slice %11 {offsets = [0, 0, 0], sizes = [2, 1, 32], strides = [1, 1, 1]} : vector<2x8x32xf32> to vector<2x1x32xf32>
    %31 = vector.shape_cast %30 : vector<2x1x32xf32> to vector<2x32xf32>
    %32 = vector.extract_strided_slice %20 {offsets = [0, 32], sizes = [2, 32], strides = [1, 1]} : vector<2x96xf32> to vector<2x32xf32>
    %33 = arith.addf %31, %32 : vector<2x32xf32>
    %34 = arith.negf %33 : vector<2x32xf32>
    %35 = math.exp %34 : vector<2x32xf32>
    %cst_14 = arith.constant 1.000000e+00 : f32
    %36 = vector.broadcast %cst_14 : f32 to vector<2x32xf32>
    %37 = arith.addf %36, %35 : vector<2x32xf32>
    %38 = arith.divf %36, %37 : vector<2x32xf32>
    %39 = vector.extract_strided_slice %12 {offsets = [0, 0, 0], sizes = [2, 1, 32], strides = [1, 1, 1]} : vector<2x8x32xf32> to vector<2x1x32xf32>
    %40 = vector.shape_cast %39 : vector<2x1x32xf32> to vector<2x32xf32>
    %41 = vector.extract_strided_slice %20 {offsets = [0, 64], sizes = [2, 32], strides = [1, 1]} : vector<2x96xf32> to vector<2x32xf32>
    %42 = arith.mulf %29, %41 : vector<2x32xf32>
    %43 = arith.addf %40, %42 : vector<2x32xf32>
    %44 = math.tanh %43 : vector<2x32xf32>
    %cst_15 = arith.constant 1.000000e+00 : f32
    %45 = vector.broadcast %cst_15 : f32 to vector<2x32xf32>
    %46 = arith.subf %45, %38 : vector<2x32xf32>
    %47 = arith.mulf %46, %44 : vector<2x32xf32>
    %48 = arith.mulf %38, %16 : vector<2x32xf32>
    %49 = arith.addf %47, %48 : vector<2x32xf32>
    %c0_16 = arith.constant 0 : index
    %c0_17 = arith.constant 0 : index
    %c0_18 = arith.constant 0 : index
    %50 = vector.load %arg6[%c0_16, %c0_17, %c0_18] : memref<2x8x32xf32, #tpu.memory_space<vmem>>, vector<2x1x32xf32>
    %51 = vector.shape_cast %50 : vector<2x1x32xf32> to vector<2x32xf32>
    %52 = vector.shape_cast %49 : vector<2x32xf32> to vector<2x1x32xf32>
    tpu.vector_store %arg6[%c0_16, %c0_17, %c0_18], %52 {strides = array<i32>} : memref<2x8x32xf32, #tpu.memory_space<vmem>>, vector<2x1x32xf32>,
    %53 = arith.truncf %49 : vector<2x32xf32> to vector<2x32xbf16>
    %cst_19 = arith.constant dense<0.000000e+00> : vector<2x96xf32>
    %54 = tpu.matmul %53, %14, %cst_19 {dimension_numbers = #tpu.dot_dimension_numbers<[1], [0], [0], [1], [0, 0, 1, 1], [], []>} : vector<2x32xbf16>, vector<32x96xbf16>, vector<2x96xf32> -> vector<2x96xf32>
    %55 = vector.broadcast %15 : vector<1x96xf32> to vector<2x96xf32>
    %56 = arith.addf %54, %55 : vector<2x96xf32>
    %57 = vector.extract_strided_slice %10 {offsets = [0, 1, 0], sizes = [2, 1, 32], strides = [1, 1, 1]} : vector<2x8x32xf32> to vector<2x1x32xf32>
    %58 = vector.shape_cast %57 : vector<2x1x32xf32> to vector<2x32xf32>
    %59 = vector.extract_strided_slice %56 {offsets = [0, 0], sizes = [2, 32], strides = [1, 1]} : vector<2x96xf32> to vector<2x32xf32>
    %60 = arith.addf %58, %59 : vector<2x32xf32>
    %61 = arith.negf %60 : vector<2x32xf32>
    %62 = math.exp %61 : vector<2x32xf32>
    %cst_20 = arith.constant 1.000000e+00 : f32
    %63 = vector.broadcast %cst_20 : f32 to vector<2x32xf32>
    %64 = arith.addf %63, %62 : vector<2x32xf32>
    %65 = arith.divf %63, %64 : vector<2x32xf32>
    %66 = vector.extract_strided_slice %11 {offsets = [0, 1, 0], sizes = [2, 1, 32], strides = [1, 1, 1]} : vector<2x8x32xf32> to vector<2x1x32xf32>
    %67 = vector.shape_cast %66 : vector<2x1x32xf32> to vector<2x32xf32>
    %68 = vector.extract_strided_slice %56 {offsets = [0, 32], sizes = [2, 32], strides = [1, 1]} : vector<2x96xf32> to vector<2x32xf32>
    %69 = arith.addf %67, %68 : vector<2x32xf32>
    %70 = arith.negf %69 : vector<2x32xf32>
    %71 = math.exp %70 : vector<2x32xf32>
    %cst_21 = arith.constant 1.000000e+00 : f32
    %72 = vector.broadcast %cst_21 : f32 to vector<2x32xf32>
    %73 = arith.addf %72, %71 : vector<2x32xf32>
    %74 = arith.divf %72, %73 : vector<2x32xf32>
    %75 = vector.extract_strided_slice %12 {offsets = [0, 1, 0], sizes = [2, 1, 32], strides = [1, 1, 1]} : vector<2x8x32xf32> to vector<2x1x32xf32>
    %76 = vector.shape_cast %75 : vector<2x1x32xf32> to vector<2x32xf32>
    %77 = vector.extract_strided_slice %56 {offsets = [0, 64], sizes = [2, 32], strides = [1, 1]} : vector<2x96xf32> to vector<2x32xf32>
    %78 = arith.mulf %65, %77 : vector<2x32xf32>
    %79 = arith.addf %76, %78 : vector<2x32xf32>
    %80 = math.tanh %79 : vector<2x32xf32>
    %cst_22 = arith.constant 1.000000e+00 : f32
    %81 = vector.broadcast %cst_22 : f32 to vector<2x32xf32>
    %82 = arith.subf %81, %74 : vector<2x32xf32>
    %83 = arith.mulf %82, %80 : vector<2x32xf32>
    %84 = arith.mulf %74, %49 : vector<2x32xf32>
    %85 = arith.addf %83, %84 : vector<2x32xf32>
    %c0_23 = arith.constant 0 : index
    %c1 = arith.constant 1 : index
    %c0_24 = arith.constant 0 : index
    %86 = vector.load %arg6[%c0_23, %c1, %c0_24] : memref<2x8x32xf32, #tpu.memory_space<vmem>>, vector<2x1x32xf32>
    %87 = vector.shape_cast %86 : vector<2x1x32xf32> to vector<2x32xf32>
    %88 = vector.shape_cast %85 : vector<2x32xf32> to vector<2x1x32xf32>
    tpu.vector_store %arg6[%c0_23, %c1, %c0_24], %88 {strides = array<i32>} : memref<2x8x32xf32, #tpu.memory_space<vmem>>, vector<2x1x32xf32>,
    %89 = arith.truncf %85 : vector<2x32xf32> to vector<2x32xbf16>
    %cst_25 = arith.constant dense<0.000000e+00> : vector<2x96xf32>
    %90 = tpu.matmul %89, %14, %cst_25 {dimension_numbers = #tpu.dot_dimension_numbers<[1], [0], [0], [1], [0, 0, 1, 1], [], []>} : vector<2x32xbf16>, vector<32x96xbf16>, vector<2x96xf32> -> vector<2x96xf32>
    %91 = vector.broadcast %15 : vector<1x96xf32> to vector<2x96xf32>
    %92 = arith.addf %90, %91 : vector<2x96xf32>
    %93 = vector.extract_strided_slice %10 {offsets = [0, 2, 0], sizes = [2, 1, 32], strides = [1, 1, 1]} : vector<2x8x32xf32> to vector<2x1x32xf32>
    %94 = vector.shape_cast %93 : vector<2x1x32xf32> to vector<2x32xf32>
    %95 = vector.extract_strided_slice %92 {offsets = [0, 0], sizes = [2, 32], strides = [1, 1]} : vector<2x96xf32> to vector<2x32xf32>
    %96 = arith.addf %94, %95 : vector<2x32xf32>
    %97 = arith.negf %96 : vector<2x32xf32>
    %98 = math.exp %97 : vector<2x32xf32>
    %cst_26 = arith.constant 1.000000e+00 : f32
    %99 = vector.broadcast %cst_26 : f32 to vector<2x32xf32>
    %100 = arith.addf %99, %98 : vector<2x32xf32>
    %101 = arith.divf %99, %100 : vector<2x32xf32>
    %102 = vector.extract_strided_slice %11 {offsets = [0, 2, 0], sizes = [2, 1, 32], strides = [1, 1, 1]} : vector<2x8x32xf32> to vector<2x1x32xf32>
    %103 = vector.shape_cast %102 : vector<2x1x32xf32> to vector<2x32xf32>
    %104 = vector.extract_strided_slice %92 {offsets = [0, 32], sizes = [2, 32], strides = [1, 1]} : vector<2x96xf32> to vector<2x32xf32>
    %105 = arith.addf %103, %104 : vector<2x32xf32>
    %106 = arith.negf %105 : vector<2x32xf32>
    %107 = math.exp %106 : vector<2x32xf32>
    %cst_27 = arith.constant 1.000000e+00 : f32
    %108 = vector.broadcast %cst_27 : f32 to vector<2x32xf32>
    %109 = arith.addf %108, %107 : vector<2x32xf32>
    %110 = arith.divf %108, %109 : vector<2x32xf32>
    %111 = vector.extract_strided_slice %12 {offsets = [0, 2, 0], sizes = [2, 1, 32], strides = [1, 1, 1]} : vector<2x8x32xf32> to vector<2x1x32xf32>
    %112 = vector.shape_cast %111 : vector<2x1x32xf32> to vector<2x32xf32>
    %113 = vector.extract_strided_slice %92 {offsets = [0, 64], sizes = [2, 32], strides = [1, 1]} : vector<2x96xf32> to vector<2x32xf32>
    %114 = arith.mulf %101, %113 : vector<2x32xf32>
    %115 = arith.addf %112, %114 : vector<2x32xf32>
    %116 = math.tanh %115 : vector<2x32xf32>
    %cst_28 = arith.constant 1.000000e+00 : f32
    %117 = vector.broadcast %cst_28 : f32 to vector<2x32xf32>
    %118 = arith.subf %117, %110 : vector<2x32xf32>
    %119 = arith.mulf %118, %116 : vector<2x32xf32>
    %120 = arith.mulf %110, %85 : vector<2x32xf32>
    %121 = arith.addf %119, %120 : vector<2x32xf32>
    %c0_29 = arith.constant 0 : index
    %c2 = arith.constant 2 : index
    %c0_30 = arith.constant 0 : index
    %122 = vector.load %arg6[%c0_29, %c2, %c0_30] : memref<2x8x32xf32, #tpu.memory_space<vmem>>, vector<2x1x32xf32>
    %123 = vector.shape_cast %122 : vector<2x1x32xf32> to vector<2x32xf32>
    %124 = vector.shape_cast %121 : vector<2x32xf32> to vector<2x1x32xf32>
    tpu.vector_store %arg6[%c0_29, %c2, %c0_30], %124 {strides = array<i32>} : memref<2x8x32xf32, #tpu.memory_space<vmem>>, vector<2x1x32xf32>,
    %125 = arith.truncf %121 : vector<2x32xf32> to vector<2x32xbf16>
    %cst_31 = arith.constant dense<0.000000e+00> : vector<2x96xf32>
    %126 = tpu.matmul %125, %14, %cst_31 {dimension_numbers = #tpu.dot_dimension_numbers<[1], [0], [0], [1], [0, 0, 1, 1], [], []>} : vector<2x32xbf16>, vector<32x96xbf16>, vector<2x96xf32> -> vector<2x96xf32>
    %127 = vector.broadcast %15 : vector<1x96xf32> to vector<2x96xf32>
    %128 = arith.addf %126, %127 : vector<2x96xf32>
    %129 = vector.extract_strided_slice %10 {offsets = [0, 3, 0], sizes = [2, 1, 32], strides = [1, 1, 1]} : vector<2x8x32xf32> to vector<2x1x32xf32>
    %130 = vector.shape_cast %129 : vector<2x1x32xf32> to vector<2x32xf32>
    %131 = vector.extract_strided_slice %128 {offsets = [0, 0], sizes = [2, 32], strides = [1, 1]} : vector<2x96xf32> to vector<2x32xf32>
    %132 = arith.addf %130, %131 : vector<2x32xf32>
    %133 = arith.negf %132 : vector<2x32xf32>
    %134 = math.exp %133 : vector<2x32xf32>
    %cst_32 = arith.constant 1.000000e+00 : f32
    %135 = vector.broadcast %cst_32 : f32 to vector<2x32xf32>
    %136 = arith.addf %135, %134 : vector<2x32xf32>
    %137 = arith.divf %135, %136 : vector<2x32xf32>
    %138 = vector.extract_strided_slice %11 {offsets = [0, 3, 0], sizes = [2, 1, 32], strides = [1, 1, 1]} : vector<2x8x32xf32> to vector<2x1x32xf32>
    %139 = vector.shape_cast %138 : vector<2x1x32xf32> to vector<2x32xf32>
    %140 = vector.extract_strided_slice %128 {offsets = [0, 32], sizes = [2, 32], strides = [1, 1]} : vector<2x96xf32> to vector<2x32xf32>
    %141 = arith.addf %139, %140 : vector<2x32xf32>
    %142 = arith.negf %141 : vector<2x32xf32>
    %143 = math.exp %142 : vector<2x32xf32>
    %cst_33 = arith.constant 1.000000e+00 : f32
    %144 = vector.broadcast %cst_33 : f32 to vector<2x32xf32>
    %145 = arith.addf %144, %143 : vector<2x32xf32>
    %146 = arith.divf %144, %145 : vector<2x32xf32>
    %147 = vector.extract_strided_slice %12 {offsets = [0, 3, 0], sizes = [2, 1, 32], strides = [1, 1, 1]} : vector<2x8x32xf32> to vector<2x1x32xf32>
    %148 = vector.shape_cast %147 : vector<2x1x32xf32> to vector<2x32xf32>
    %149 = vector.extract_strided_slice %128 {offsets = [0, 64], sizes = [2, 32], strides = [1, 1]} : vector<2x96xf32> to vector<2x32xf32>
    %150 = arith.mulf %137, %149 : vector<2x32xf32>
    %151 = arith.addf %148, %150 : vector<2x32xf32>
    %152 = math.tanh %151 : vector<2x32xf32>
    %cst_34 = arith.constant 1.000000e+00 : f32
    %153 = vector.broadcast %cst_34 : f32 to vector<2x32xf32>
    %154 = arith.subf %153, %146 : vector<2x32xf32>
    %155 = arith.mulf %154, %152 : vector<2x32xf32>
    %156 = arith.mulf %146, %121 : vector<2x32xf32>
    %157 = arith.addf %155, %156 : vector<2x32xf32>
    %c0_35 = arith.constant 0 : index
    %c3 = arith.constant 3 : index
    %c0_36 = arith.constant 0 : index
    %158 = vector.load %arg6[%c0_35, %c3, %c0_36] : memref<2x8x32xf32, #tpu.memory_space<vmem>>, vector<2x1x32xf32>
    %159 = vector.shape_cast %158 : vector<2x1x32xf32> to vector<2x32xf32>
    %160 = vector.shape_cast %157 : vector<2x32xf32> to vector<2x1x32xf32>
    tpu.vector_store %arg6[%c0_35, %c3, %c0_36], %160 {strides = array<i32>} : memref<2x8x32xf32, #tpu.memory_space<vmem>>, vector<2x1x32xf32>,
    %161 = arith.truncf %157 : vector<2x32xf32> to vector<2x32xbf16>
    %cst_37 = arith.constant dense<0.000000e+00> : vector<2x96xf32>
    %162 = tpu.matmul %161, %14, %cst_37 {dimension_numbers = #tpu.dot_dimension_numbers<[1], [0], [0], [1], [0, 0, 1, 1], [], []>} : vector<2x32xbf16>, vector<32x96xbf16>, vector<2x96xf32> -> vector<2x96xf32>
    %163 = vector.broadcast %15 : vector<1x96xf32> to vector<2x96xf32>
    %164 = arith.addf %162, %163 : vector<2x96xf32>
    %165 = vector.extract_strided_slice %10 {offsets = [0, 4, 0], sizes = [2, 1, 32], strides = [1, 1, 1]} : vector<2x8x32xf32> to vector<2x1x32xf32>
    %166 = vector.shape_cast %165 : vector<2x1x32xf32> to vector<2x32xf32>
    %167 = vector.extract_strided_slice %164 {offsets = [0, 0], sizes = [2, 32], strides = [1, 1]} : vector<2x96xf32> to vector<2x32xf32>
    %168 = arith.addf %166, %167 : vector<2x32xf32>
    %169 = arith.negf %168 : vector<2x32xf32>
    %170 = math.exp %169 : vector<2x32xf32>
    %cst_38 = arith.constant 1.000000e+00 : f32
    %171 = vector.broadcast %cst_38 : f32 to vector<2x32xf32>
    %172 = arith.addf %171, %170 : vector<2x32xf32>
    %173 = arith.divf %171, %172 : vector<2x32xf32>
    %174 = vector.extract_strided_slice %11 {offsets = [0, 4, 0], sizes = [2, 1, 32], strides = [1, 1, 1]} : vector<2x8x32xf32> to vector<2x1x32xf32>
    %175 = vector.shape_cast %174 : vector<2x1x32xf32> to vector<2x32xf32>
    %176 = vector.extract_strided_slice %164 {offsets = [0, 32], sizes = [2, 32], strides = [1, 1]} : vector<2x96xf32> to vector<2x32xf32>
    %177 = arith.addf %175, %176 : vector<2x32xf32>
    %178 = arith.negf %177 : vector<2x32xf32>
    %179 = math.exp %178 : vector<2x32xf32>
    %cst_39 = arith.constant 1.000000e+00 : f32
    %180 = vector.broadcast %cst_39 : f32 to vector<2x32xf32>
    %181 = arith.addf %180, %179 : vector<2x32xf32>
    %182 = arith.divf %180, %181 : vector<2x32xf32>
    %183 = vector.extract_strided_slice %12 {offsets = [0, 4, 0], sizes = [2, 1, 32], strides = [1, 1, 1]} : vector<2x8x32xf32> to vector<2x1x32xf32>
    %184 = vector.shape_cast %183 : vector<2x1x32xf32> to vector<2x32xf32>
    %185 = vector.extract_strided_slice %164 {offsets = [0, 64], sizes = [2, 32], strides = [1, 1]} : vector<2x96xf32> to vector<2x32xf32>
    %186 = arith.mulf %173, %185 : vector<2x32xf32>
    %187 = arith.addf %184, %186 : vector<2x32xf32>
    %188 = math.tanh %187 : vector<2x32xf32>
    %cst_40 = arith.constant 1.000000e+00 : f32
    %189 = vector.broadcast %cst_40 : f32 to vector<2x32xf32>
    %190 = arith.subf %189, %182 : vector<2x32xf32>
    %191 = arith.mulf %190, %188 : vector<2x32xf32>
    %192 = arith.mulf %182, %157 : vector<2x32xf32>
    %193 = arith.addf %191, %192 : vector<2x32xf32>
    %c0_41 = arith.constant 0 : index
    %c4 = arith.constant 4 : index
    %c0_42 = arith.constant 0 : index
    %194 = vector.load %arg6[%c0_41, %c4, %c0_42] : memref<2x8x32xf32, #tpu.memory_space<vmem>>, vector<2x1x32xf32>
    %195 = vector.shape_cast %194 : vector<2x1x32xf32> to vector<2x32xf32>
    %196 = vector.shape_cast %193 : vector<2x32xf32> to vector<2x1x32xf32>
    tpu.vector_store %arg6[%c0_41, %c4, %c0_42], %196 {strides = array<i32>} : memref<2x8x32xf32, #tpu.memory_space<vmem>>, vector<2x1x32xf32>,
    %197 = arith.truncf %193 : vector<2x32xf32> to vector<2x32xbf16>
    %cst_43 = arith.constant dense<0.000000e+00> : vector<2x96xf32>
    %198 = tpu.matmul %197, %14, %cst_43 {dimension_numbers = #tpu.dot_dimension_numbers<[1], [0], [0], [1], [0, 0, 1, 1], [], []>} : vector<2x32xbf16>, vector<32x96xbf16>, vector<2x96xf32> -> vector<2x96xf32>
    %199 = vector.broadcast %15 : vector<1x96xf32> to vector<2x96xf32>
    %200 = arith.addf %198, %199 : vector<2x96xf32>
    %201 = vector.extract_strided_slice %10 {offsets = [0, 5, 0], sizes = [2, 1, 32], strides = [1, 1, 1]} : vector<2x8x32xf32> to vector<2x1x32xf32>
    %202 = vector.shape_cast %201 : vector<2x1x32xf32> to vector<2x32xf32>
    %203 = vector.extract_strided_slice %200 {offsets = [0, 0], sizes = [2, 32], strides = [1, 1]} : vector<2x96xf32> to vector<2x32xf32>
    %204 = arith.addf %202, %203 : vector<2x32xf32>
    %205 = arith.negf %204 : vector<2x32xf32>
    %206 = math.exp %205 : vector<2x32xf32>
    %cst_44 = arith.constant 1.000000e+00 : f32
    %207 = vector.broadcast %cst_44 : f32 to vector<2x32xf32>
    %208 = arith.addf %207, %206 : vector<2x32xf32>
    %209 = arith.divf %207, %208 : vector<2x32xf32>
    %210 = vector.extract_strided_slice %11 {offsets = [0, 5, 0], sizes = [2, 1, 32], strides = [1, 1, 1]} : vector<2x8x32xf32> to vector<2x1x32xf32>
    %211 = vector.shape_cast %210 : vector<2x1x32xf32> to vector<2x32xf32>
    %212 = vector.extract_strided_slice %200 {offsets = [0, 32], sizes = [2, 32], strides = [1, 1]} : vector<2x96xf32> to vector<2x32xf32>
    %213 = arith.addf %211, %212 : vector<2x32xf32>
    %214 = arith.negf %213 : vector<2x32xf32>
    %215 = math.exp %214 : vector<2x32xf32>
    %cst_45 = arith.constant 1.000000e+00 : f32
    %216 = vector.broadcast %cst_45 : f32 to vector<2x32xf32>
    %217 = arith.addf %216, %215 : vector<2x32xf32>
    %218 = arith.divf %216, %217 : vector<2x32xf32>
    %219 = vector.extract_strided_slice %12 {offsets = [0, 5, 0], sizes = [2, 1, 32], strides = [1, 1, 1]} : vector<2x8x32xf32> to vector<2x1x32xf32>
    %220 = vector.shape_cast %219 : vector<2x1x32xf32> to vector<2x32xf32>
    %221 = vector.extract_strided_slice %200 {offsets = [0, 64], sizes = [2, 32], strides = [1, 1]} : vector<2x96xf32> to vector<2x32xf32>
    %222 = arith.mulf %209, %221 : vector<2x32xf32>
    %223 = arith.addf %220, %222 : vector<2x32xf32>
    %224 = math.tanh %223 : vector<2x32xf32>
    %cst_46 = arith.constant 1.000000e+00 : f32
    %225 = vector.broadcast %cst_46 : f32 to vector<2x32xf32>
    %226 = arith.subf %225, %218 : vector<2x32xf32>
    %227 = arith.mulf %226, %224 : vector<2x32xf32>
    %228 = arith.mulf %218, %193 : vector<2x32xf32>
    %229 = arith.addf %227, %228 : vector<2x32xf32>
    %c0_47 = arith.constant 0 : index
    %c5 = arith.constant 5 : index
    %c0_48 = arith.constant 0 : index
    %230 = vector.load %arg6[%c0_47, %c5, %c0_48] : memref<2x8x32xf32, #tpu.memory_space<vmem>>, vector<2x1x32xf32>
    %231 = vector.shape_cast %230 : vector<2x1x32xf32> to vector<2x32xf32>
    %232 = vector.shape_cast %229 : vector<2x32xf32> to vector<2x1x32xf32>
    tpu.vector_store %arg6[%c0_47, %c5, %c0_48], %232 {strides = array<i32>} : memref<2x8x32xf32, #tpu.memory_space<vmem>>, vector<2x1x32xf32>,
    %233 = arith.truncf %229 : vector<2x32xf32> to vector<2x32xbf16>
    %cst_49 = arith.constant dense<0.000000e+00> : vector<2x96xf32>
    %234 = tpu.matmul %233, %14, %cst_49 {dimension_numbers = #tpu.dot_dimension_numbers<[1], [0], [0], [1], [0, 0, 1, 1], [], []>} : vector<2x32xbf16>, vector<32x96xbf16>, vector<2x96xf32> -> vector<2x96xf32>
    %235 = vector.broadcast %15 : vector<1x96xf32> to vector<2x96xf32>
    %236 = arith.addf %234, %235 : vector<2x96xf32>
    %237 = vector.extract_strided_slice %10 {offsets = [0, 6, 0], sizes = [2, 1, 32], strides = [1, 1, 1]} : vector<2x8x32xf32> to vector<2x1x32xf32>
    %238 = vector.shape_cast %237 : vector<2x1x32xf32> to vector<2x32xf32>
    %239 = vector.extract_strided_slice %236 {offsets = [0, 0], sizes = [2, 32], strides = [1, 1]} : vector<2x96xf32> to vector<2x32xf32>
    %240 = arith.addf %238, %239 : vector<2x32xf32>
    %241 = arith.negf %240 : vector<2x32xf32>
    %242 = math.exp %241 : vector<2x32xf32>
    %cst_50 = arith.constant 1.000000e+00 : f32
    %243 = vector.broadcast %cst_50 : f32 to vector<2x32xf32>
    %244 = arith.addf %243, %242 : vector<2x32xf32>
    %245 = arith.divf %243, %244 : vector<2x32xf32>
    %246 = vector.extract_strided_slice %11 {offsets = [0, 6, 0], sizes = [2, 1, 32], strides = [1, 1, 1]} : vector<2x8x32xf32> to vector<2x1x32xf32>
    %247 = vector.shape_cast %246 : vector<2x1x32xf32> to vector<2x32xf32>
    %248 = vector.extract_strided_slice %236 {offsets = [0, 32], sizes = [2, 32], strides = [1, 1]} : vector<2x96xf32> to vector<2x32xf32>
    %249 = arith.addf %247, %248 : vector<2x32xf32>
    %250 = arith.negf %249 : vector<2x32xf32>
    %251 = math.exp %250 : vector<2x32xf32>
    %cst_51 = arith.constant 1.000000e+00 : f32
    %252 = vector.broadcast %cst_51 : f32 to vector<2x32xf32>
    %253 = arith.addf %252, %251 : vector<2x32xf32>
    %254 = arith.divf %252, %253 : vector<2x32xf32>
    %255 = vector.extract_strided_slice %12 {offsets = [0, 6, 0], sizes = [2, 1, 32], strides = [1, 1, 1]} : vector<2x8x32xf32> to vector<2x1x32xf32>
    %256 = vector.shape_cast %255 : vector<2x1x32xf32> to vector<2x32xf32>
    %257 = vector.extract_strided_slice %236 {offsets = [0, 64], sizes = [2, 32], strides = [1, 1]} : vector<2x96xf32> to vector<2x32xf32>
    %258 = arith.mulf %245, %257 : vector<2x32xf32>
    %259 = arith.addf %256, %258 : vector<2x32xf32>
    %260 = math.tanh %259 : vector<2x32xf32>
    %cst_52 = arith.constant 1.000000e+00 : f32
    %261 = vector.broadcast %cst_52 : f32 to vector<2x32xf32>
    %262 = arith.subf %261, %254 : vector<2x32xf32>
    %263 = arith.mulf %262, %260 : vector<2x32xf32>
    %264 = arith.mulf %254, %229 : vector<2x32xf32>
    %265 = arith.addf %263, %264 : vector<2x32xf32>
    %c0_53 = arith.constant 0 : index
    %c6 = arith.constant 6 : index
    %c0_54 = arith.constant 0 : index
    %266 = vector.load %arg6[%c0_53, %c6, %c0_54] : memref<2x8x32xf32, #tpu.memory_space<vmem>>, vector<2x1x32xf32>
    %267 = vector.shape_cast %266 : vector<2x1x32xf32> to vector<2x32xf32>
    %268 = vector.shape_cast %265 : vector<2x32xf32> to vector<2x1x32xf32>
    tpu.vector_store %arg6[%c0_53, %c6, %c0_54], %268 {strides = array<i32>} : memref<2x8x32xf32, #tpu.memory_space<vmem>>, vector<2x1x32xf32>,
    %269 = arith.truncf %265 : vector<2x32xf32> to vector<2x32xbf16>
    %cst_55 = arith.constant dense<0.000000e+00> : vector<2x96xf32>
    %270 = tpu.matmul %269, %14, %cst_55 {dimension_numbers = #tpu.dot_dimension_numbers<[1], [0], [0], [1], [0, 0, 1, 1], [], []>} : vector<2x32xbf16>, vector<32x96xbf16>, vector<2x96xf32> -> vector<2x96xf32>
    %271 = vector.broadcast %15 : vector<1x96xf32> to vector<2x96xf32>
    %272 = arith.addf %270, %271 : vector<2x96xf32>
    %273 = vector.extract_strided_slice %10 {offsets = [0, 7, 0], sizes = [2, 1, 32], strides = [1, 1, 1]} : vector<2x8x32xf32> to vector<2x1x32xf32>
    %274 = vector.shape_cast %273 : vector<2x1x32xf32> to vector<2x32xf32>
    %275 = vector.extract_strided_slice %272 {offsets = [0, 0], sizes = [2, 32], strides = [1, 1]} : vector<2x96xf32> to vector<2x32xf32>
    %276 = arith.addf %274, %275 : vector<2x32xf32>
    %277 = arith.negf %276 : vector<2x32xf32>
    %278 = math.exp %277 : vector<2x32xf32>
    %cst_56 = arith.constant 1.000000e+00 : f32
    %279 = vector.broadcast %cst_56 : f32 to vector<2x32xf32>
    %280 = arith.addf %279, %278 : vector<2x32xf32>
    %281 = arith.divf %279, %280 : vector<2x32xf32>
    %282 = vector.extract_strided_slice %11 {offsets = [0, 7, 0], sizes = [2, 1, 32], strides = [1, 1, 1]} : vector<2x8x32xf32> to vector<2x1x32xf32>
    %283 = vector.shape_cast %282 : vector<2x1x32xf32> to vector<2x32xf32>
    %284 = vector.extract_strided_slice %272 {offsets = [0, 32], sizes = [2, 32], strides = [1, 1]} : vector<2x96xf32> to vector<2x32xf32>
    %285 = arith.addf %283, %284 : vector<2x32xf32>
    %286 = arith.negf %285 : vector<2x32xf32>
    %287 = math.exp %286 : vector<2x32xf32>
    %cst_57 = arith.constant 1.000000e+00 : f32
    %288 = vector.broadcast %cst_57 : f32 to vector<2x32xf32>
    %289 = arith.addf %288, %287 : vector<2x32xf32>
    %290 = arith.divf %288, %289 : vector<2x32xf32>
    %291 = vector.extract_strided_slice %12 {offsets = [0, 7, 0], sizes = [2, 1, 32], strides = [1, 1, 1]} : vector<2x8x32xf32> to vector<2x1x32xf32>
    %292 = vector.shape_cast %291 : vector<2x1x32xf32> to vector<2x32xf32>
    %293 = vector.extract_strided_slice %272 {offsets = [0, 64], sizes = [2, 32], strides = [1, 1]} : vector<2x96xf32> to vector<2x32xf32>
    %294 = arith.mulf %281, %293 : vector<2x32xf32>
    %295 = arith.addf %292, %294 : vector<2x32xf32>
    %296 = math.tanh %295 : vector<2x32xf32>
    %cst_58 = arith.constant 1.000000e+00 : f32
    %297 = vector.broadcast %cst_58 : f32 to vector<2x32xf32>
    %298 = arith.subf %297, %290 : vector<2x32xf32>
    %299 = arith.mulf %298, %296 : vector<2x32xf32>
    %300 = arith.mulf %290, %265 : vector<2x32xf32>
    %301 = arith.addf %299, %300 : vector<2x32xf32>
    %c0_59 = arith.constant 0 : index
    %c7 = arith.constant 7 : index
    %c0_60 = arith.constant 0 : index
    %302 = vector.load %arg6[%c0_59, %c7, %c0_60] : memref<2x8x32xf32, #tpu.memory_space<vmem>>, vector<2x1x32xf32>
    %303 = vector.shape_cast %302 : vector<2x1x32xf32> to vector<2x32xf32>
    %304 = vector.shape_cast %301 : vector<2x32xf32> to vector<2x1x32xf32>
    tpu.vector_store %arg6[%c0_59, %c7, %c0_60], %304 {strides = array<i32>} : memref<2x8x32xf32, #tpu.memory_space<vmem>>, vector<2x1x32xf32>,
    return
  }
}

module attributes {stable_mosaic.version = 11 : i64} {
  func.func @_linear_kernel(%arg0: i32, %arg1: i32, %arg2: i32, %arg3: memref<2x32xf32, #tpu.memory_space<vmem>>, %arg4: memref<32x64xf32, #tpu.memory_space<vmem>>, %arg5: memref<1x64xf32, #tpu.memory_space<vmem>>, %arg6: memref<2x64xf32, #tpu.memory_space<vmem>>, %arg7: memref<2x64xf32, #tpu.memory_space<vmem>>) attributes {dimension_semantics = [#tpu.dimension_semantics<parallel>, #tpu.dimension_semantics<parallel>, #tpu.dimension_semantics<arbitrary>], iteration_bounds = array<i64: 1, 1, 1>, scalar_prefetch = 0 : i64, scratch_operands = 1 : i64, tpu.core_type = #tpu.core_type<tc>, window_params = [{transform_indices = @transform_0, window_bounds = array<i64: 2, 32>}, {transform_indices = @transform_1, window_bounds = array<i64: 32, 64>}, {transform_indices = @transform_2, window_bounds = array<i64: 1, 64>}, {transform_indices = @transform_3, window_bounds = array<i64: 2, 64>}]} {
    %c0_i32 = arith.constant 0 : i32
    %0 = arith.cmpi eq, %arg2, %c0_i32 : i32
    %1 = arith.extui %0 : i1 to i32
    %c0_i32_0 = arith.constant 0 : i32
    %2 = arith.cmpi ne, %1, %c0_i32_0 : i32
    scf.if %2 {
      %cst_10 = arith.constant 0.000000e+00 : f32
      %12 = vector.broadcast %cst_10 : f32 to vector<2x64xf32>
      %c0_11 = arith.constant 0 : index
      %c0_12 = arith.constant 0 : index
      %13 = vector.load %arg7[%c0_11, %c0_12] : memref<2x64xf32, #tpu.memory_space<vmem>>, vector<2x64xf32>
      tpu.vector_store %arg7[%c0_11, %c0_12], %12 {strides = array<i32>} : memref<2x64xf32, #tpu.memory_space<vmem>>, vector<2x64xf32>,
    } else {
    }
    %c0 = arith.constant 0 : index
    %c0_1 = arith.constant 0 : index
    %3 = vector.load %arg7[%c0, %c0_1] : memref<2x64xf32, #tpu.memory_space<vmem>>, vector<2x64xf32>
    %c0_2 = arith.constant 0 : index
    %c0_3 = arith.constant 0 : index
    %4 = vector.load %arg3[%c0_2, %c0_3] : memref<2x32xf32, #tpu.memory_space<vmem>>, vector<2x32xf32>
    %c0_4 = arith.constant 0 : index
    %c0_5 = arith.constant 0 : index
    %5 = vector.load %arg4[%c0_4, %c0_5] : memref<32x64xf32, #tpu.memory_space<vmem>>, vector<32x64xf32>
    %cst = arith.constant dense<0.000000e+00> : vector<2x64xf32>
    %6 = tpu.matmul %4, %5, %cst {dimension_numbers = #tpu.dot_dimension_numbers<[1], [0], [0], [1], [0, 0, 1, 1], [], []>} : vector<2x32xf32>, vector<32x64xf32>, vector<2x64xf32> -> vector<2x64xf32>
    %7 = arith.addf %3, %6 : vector<2x64xf32>
    %c0_6 = arith.constant 0 : index
    %c0_7 = arith.constant 0 : index
    %8 = vector.load %arg7[%c0_6, %c0_7] : memref<2x64xf32, #tpu.memory_space<vmem>>, vector<2x64xf32>
    tpu.vector_store %arg7[%c0_6, %c0_7], %7 {strides = array<i32>} : memref<2x64xf32, #tpu.memory_space<vmem>>, vector<2x64xf32>,
    %c0_i32_8 = arith.constant 0 : i32
    %9 = arith.cmpi eq, %arg2, %c0_i32_8 : i32
    %10 = arith.extui %9 : i1 to i32
    %c0_i32_9 = arith.constant 0 : i32
    %11 = arith.cmpi ne, %10, %c0_i32_9 : i32
    scf.if %11 {
      %c0_10 = arith.constant 0 : index
      %c0_11 = arith.constant 0 : index
      %12 = vector.load %arg7[%c0_10, %c0_11] : memref<2x64xf32, #tpu.memory_space<vmem>>, vector<2x64xf32>
      %c0_12 = arith.constant 0 : index
      %c0_13 = arith.constant 0 : index
      %13 = vector.load %arg5[%c0_12, %c0_13] : memref<1x64xf32, #tpu.memory_space<vmem>>, vector<1x64xf32>
      %14 = vector.broadcast %13 : vector<1x64xf32> to vector<2x64xf32>
      %15 = arith.addf %12, %14 : vector<2x64xf32>
      %c0_14 = arith.constant 0 : index
      %c0_15 = arith.constant 0 : index
      %16 = vector.load %arg6[%c0_14, %c0_15] : memref<2x64xf32, #tpu.memory_space<vmem>>, vector<2x64xf32>
      tpu.vector_store %arg6[%c0_14, %c0_15], %15 {strides = array<i32>} : memref<2x64xf32, #tpu.memory_space<vmem>>, vector<2x64xf32>,
    } else {
    }
    return
  }
  func.func @transform_0(%arg0: i32, %arg1: i32, %arg2: i32) -> (i32, i32) {
    %c0_i32 = arith.constant 0 : i32
    return %arg0, %arg2 : i32, i32
  }
  func.func @transform_1(%arg0: i32, %arg1: i32, %arg2: i32) -> (i32, i32) {
    %c0_i32 = arith.constant 0 : i32
    return %arg2, %arg1 : i32, i32
  }
  func.func @transform_2(%arg0: i32, %arg1: i32, %arg2: i32) -> (i32, i32) {
    %c0_i32 = arith.constant 0 : i32
    %c0_i32_0 = arith.constant 0 : i32
    return %c0_i32, %arg1 : i32, i32
  }
  func.func @transform_3(%arg0: i32, %arg1: i32, %arg2: i32) -> (i32, i32) {
    %c0_i32 = arith.constant 0 : i32
    return %arg0, %arg1 : i32, i32
  }
}

module attributes {stable_mosaic.version = 11 : i64} {
  func.func @_gmm_kl_kernel(%arg0: memref<2x32xf32, #tpu.memory_space<vmem>>, %arg1: memref<2x32xf32, #tpu.memory_space<vmem>>, %arg2: memref<2x32xf32, #tpu.memory_space<vmem>>, %arg3: memref<10x32xf32, #tpu.memory_space<vmem>>, %arg4: memref<10x32xf32, #tpu.memory_space<vmem>>, %arg5: memref<1x10xf32, #tpu.memory_space<vmem>>, %arg6: memref<1x10xf32, #tpu.memory_space<vmem>>, %arg7: memref<1x10xf32, #tpu.memory_space<vmem>>, %arg8: memref<2x1xf32, #tpu.memory_space<vmem>>) attributes {dimension_semantics = [], scalar_prefetch = 0 : i64, scratch_operands = 0 : i64, tpu.core_type = #tpu.core_type<tc>} {
    %c0 = arith.constant 0 : index
    %c0_0 = arith.constant 0 : index
    %0 = vector.load %arg0[%c0, %c0_0] : memref<2x32xf32, #tpu.memory_space<vmem>>, vector<2x32xf32>
    %c0_1 = arith.constant 0 : index
    %c0_2 = arith.constant 0 : index
    %1 = vector.load %arg1[%c0_1, %c0_2] : memref<2x32xf32, #tpu.memory_space<vmem>>, vector<2x32xf32>
    %c0_3 = arith.constant 0 : index
    %c0_4 = arith.constant 0 : index
    %2 = vector.load %arg2[%c0_3, %c0_4] : memref<2x32xf32, #tpu.memory_space<vmem>>, vector<2x32xf32>
    %c0_5 = arith.constant 0 : index
    %c0_6 = arith.constant 0 : index
    %3 = vector.load %arg3[%c0_5, %c0_6] : memref<10x32xf32, #tpu.memory_space<vmem>>, vector<10x32xf32>
    %c0_7 = arith.constant 0 : index
    %c0_8 = arith.constant 0 : index
    %4 = vector.load %arg4[%c0_7, %c0_8] : memref<10x32xf32, #tpu.memory_space<vmem>>, vector<10x32xf32>
    %c0_9 = arith.constant 0 : index
    %c0_10 = arith.constant 0 : index
    %5 = vector.load %arg5[%c0_9, %c0_10] : memref<1x10xf32, #tpu.memory_space<vmem>>, vector<1x10xf32>
    %c0_11 = arith.constant 0 : index
    %c0_12 = arith.constant 0 : index
    %6 = vector.load %arg6[%c0_11, %c0_12] : memref<1x10xf32, #tpu.memory_space<vmem>>, vector<1x10xf32>
    %c0_13 = arith.constant 0 : index
    %c0_14 = arith.constant 0 : index
    %7 = vector.load %arg7[%c0_13, %c0_14] : memref<1x10xf32, #tpu.memory_space<vmem>>, vector<1x10xf32>
    %8 = arith.mulf %3, %4 : vector<10x32xf32>
    %cst = arith.constant 6.28318548 : f32
    %9 = math.log %cst : f32
    %cst_15 = arith.constant 3.200000e+01 : f32
    %10 = arith.mulf %cst_15, %9 : f32
    %11 = vector.broadcast %10 : f32 to vector<1x10xf32>
    %12 = arith.addf %11, %5 : vector<1x10xf32>
    %13 = arith.mulf %0, %0 : vector<2x32xf32>
    %cst_16 = arith.constant dense<0.000000e+00> : vector<2x10xf32>
    %14 = tpu.matmul %13, %4, %cst_16 {dimension_numbers = #tpu.dot_dimension_numbers<[1], [1], [0], [0], [0, 0, 1, 0], [], []>} : vector<2x32xf32>, vector<10x32xf32>, vector<2x10xf32> -> vector<2x10xf32>
    %cst_17 = arith.constant dense<0.000000e+00> : vector<2x10xf32>
    %15 = tpu.matmul %0, %8, %cst_17 {dimension_numbers = #tpu.dot_dimension_numbers<[1], [1], [0], [0], [0, 0, 1, 0], [], []>} : vector<2x32xf32>, vector<10x32xf32>, vector<2x10xf32> -> vector<2x10xf32>
    %cst_18 = arith.constant 2.000000e+00 : f32
    %16 = vector.broadcast %cst_18 : f32 to vector<2x10xf32>
    %17 = arith.mulf %16, %15 : vector<2x10xf32>
    %18 = arith.subf %14, %17 : vector<2x10xf32>
    %19 = vector.broadcast %6 : vector<1x10xf32> to vector<2x10xf32>
    %20 = arith.addf %18, %19 : vector<2x10xf32>
    %21 = vector.broadcast %12 : vector<1x10xf32> to vector<2x10xf32>
    %22 = arith.addf %21, %20 : vector<2x10xf32>
    %cst_19 = arith.constant -5.000000e-01 : f32
    %23 = vector.broadcast %cst_19 : f32 to vector<2x10xf32>
    %24 = arith.mulf %23, %22 : vector<2x10xf32>
    %25 = vector.broadcast %7 : vector<1x10xf32> to vector<2x10xf32>
    %26 = arith.addf %25, %24 : vector<2x10xf32>
    %cst_20 = arith.constant dense<0xFF800000> : vector<2xf32>
    %27 = vector.multi_reduction <maximumf>, %26, %cst_20 [1] : vector<2x10xf32> to vector<2xf32>
    %28 = vector.shape_cast %27 : vector<2xf32> to vector<2x1xf32>
    %29 = vector.broadcast %28 : vector<2x1xf32> to vector<2x10xf32>
    %30 = arith.subf %26, %29 : vector<2x10xf32>
    %31 = math.exp %30 : vector<2x10xf32>
    %cst_21 = arith.constant dense<0.000000e+00> : vector<2xf32>
    %32 = vector.multi_reduction <add>, %31, %cst_21 [1] : vector<2x10xf32> to vector<2xf32>
    %33 = vector.shape_cast %32 : vector<2xf32> to vector<2x1xf32>
    %34 = vector.broadcast %33 : vector<2x1xf32> to vector<2x10xf32>
    %35 = arith.divf %31, %34 : vector<2x10xf32>
    %36 = math.exp %2 : vector<2x32xf32>
    %cst_22 = arith.constant dense<0.000000e+00> : vector<2x10xf32>
    %37 = tpu.matmul %36, %4, %cst_22 {dimension_numbers = #tpu.dot_dimension_numbers<[1], [1], [0], [0], [0, 0, 1, 0], [], []>} : vector<2x32xf32>, vector<10x32xf32>, vector<2x10xf32> -> vector<2x10xf32>
    %38 = vector.broadcast %5 : vector<1x10xf32> to vector<2x10xf32>
    %39 = arith.addf %38, %37 : vector<2x10xf32>
    %40 = arith.mulf %1, %1 : vector<2x32xf32>
    %cst_23 = arith.constant dense<0.000000e+00> : vector<2x10xf32>
    %41 = tpu.matmul %40, %4, %cst_23 {dimension_numbers = #tpu.dot_dimension_numbers<[1], [1], [0], [0], [0, 0, 1, 0], [], []>} : vector<2x32xf32>, vector<10x32xf32>, vector<2x10xf32> -> vector<2x10xf32>
    %cst_24 = arith.constant dense<0.000000e+00> : vector<2x10xf32>
    %42 = tpu.matmul %1, %8, %cst_24 {dimension_numbers = #tpu.dot_dimension_numbers<[1], [1], [0], [0], [0, 0, 1, 0], [], []>} : vector<2x32xf32>, vector<10x32xf32>, vector<2x10xf32> -> vector<2x10xf32>
    %cst_25 = arith.constant 2.000000e+00 : f32
    %43 = vector.broadcast %cst_25 : f32 to vector<2x10xf32>
    %44 = arith.mulf %43, %42 : vector<2x10xf32>
    %45 = arith.subf %41, %44 : vector<2x10xf32>
    %46 = vector.broadcast %6 : vector<1x10xf32> to vector<2x10xf32>
    %47 = arith.addf %45, %46 : vector<2x10xf32>
    %48 = arith.addf %39, %47 : vector<2x10xf32>
    %cst_26 = arith.constant 5.000000e-01 : f32
    %49 = vector.broadcast %cst_26 : f32 to vector<2x10xf32>
    %50 = arith.mulf %49, %48 : vector<2x10xf32>
    %51 = arith.mulf %35, %50 : vector<2x10xf32>
    %cst_27 = arith.constant dense<0.000000e+00> : vector<2xf32>
    %52 = vector.multi_reduction <add>, %51, %cst_27 [1] : vector<2x10xf32> to vector<2xf32>
    %53 = vector.shape_cast %52 : vector<2xf32> to vector<2x1xf32>
    %cst_28 = arith.constant 1.000000e+00 : f32
    %54 = vector.broadcast %cst_28 : f32 to vector<2x32xf32>
    %55 = arith.addf %54, %2 : vector<2x32xf32>
    %cst_29 = arith.constant dense<0.000000e+00> : vector<2xf32>
    %56 = vector.multi_reduction <add>, %55, %cst_29 [1] : vector<2x32xf32> to vector<2xf32>
    %57 = vector.shape_cast %56 : vector<2xf32> to vector<2x1xf32>
    %cst_30 = arith.constant 5.000000e-01 : f32
    %58 = vector.broadcast %cst_30 : f32 to vector<2x1xf32>
    %59 = arith.mulf %58, %57 : vector<2x1xf32>
    %60 = arith.subf %53, %59 : vector<2x1xf32>
    %cst_31 = arith.constant 1.000000e-10 : f32
    %61 = vector.broadcast %cst_31 : f32 to vector<2x10xf32>
    %62 = arith.addf %35, %61 : vector<2x10xf32>
    %63 = math.log %62 : vector<2x10xf32>
    %64 = vector.broadcast %7 : vector<1x10xf32> to vector<2x10xf32>
    %65 = arith.subf %63, %64 : vector<2x10xf32>
    %66 = arith.mulf %35, %65 : vector<2x10xf32>
    %cst_32 = arith.constant dense<0.000000e+00> : vector<2xf32>
    %67 = vector.multi_reduction <add>, %66, %cst_32 [1] : vector<2x10xf32> to vector<2xf32>
    %68 = vector.shape_cast %67 : vector<2xf32> to vector<2x1xf32>
    %69 = arith.addf %60, %68 : vector<2x1xf32>
    %c0_33 = arith.constant 0 : index
    %c0_34 = arith.constant 0 : index
    %70 = vector.load %arg8[%c0_33, %c0_34] : memref<2x1xf32, #tpu.memory_space<vmem>>, vector<2x1xf32>
    tpu.vector_store %arg8[%c0_33, %c0_34], %69 {strides = array<i32>} : memref<2x1xf32, #tpu.memory_space<vmem>>, vector<2x1xf32>,
    return
  }
}

module attributes {stable_mosaic.version = 11 : i64} {
  func.func @_proj_ce_kernel(%arg0: i32, %arg1: i32, %arg2: memref<16x32xbf16, #tpu.memory_space<vmem>>, %arg3: memref<32x32xbf16, #tpu.memory_space<vmem>>, %arg4: memref<1x32xf32, #tpu.memory_space<vmem>>, %arg5: memref<16x1xi32, #tpu.memory_space<vmem>>, %arg6: memref<16x1xf32, #tpu.memory_space<vmem>>, %arg7: memref<16x1xf32, #tpu.memory_space<vmem>>, %arg8: memref<16x1xf32, #tpu.memory_space<vmem>>, %arg9: memref<16x1xf32, #tpu.memory_space<vmem>>, %arg10: memref<16x1xf32, #tpu.memory_space<vmem>>) attributes {dimension_semantics = [#tpu.dimension_semantics<parallel>, #tpu.dimension_semantics<arbitrary>], iteration_bounds = array<i64: 1, 1>, scalar_prefetch = 0 : i64, scratch_operands = 3 : i64, tpu.core_type = #tpu.core_type<tc>, window_params = [{transform_indices = @transform_0, window_bounds = array<i64: 16, 32>}, {transform_indices = @transform_1, window_bounds = array<i64: 32, 32>}, {transform_indices = @transform_2, window_bounds = array<i64: 1, 32>}, {transform_indices = @transform_3, window_bounds = array<i64: 16, 1>}, {transform_indices = @transform_4, window_bounds = array<i64: 16, 1>}, {transform_indices = @transform_5, window_bounds = array<i64: 16, 1>}]} {
    %c0_i32 = arith.constant 0 : i32
    %0 = arith.cmpi eq, %arg1, %c0_i32 : i32
    %1 = arith.extui %0 : i1 to i32
    %c0_i32_0 = arith.constant 0 : i32
    %2 = arith.cmpi ne, %1, %c0_i32_0 : i32
    scf.if %2 {
      %cst_26 = arith.constant 0xFF800000 : f32
      %42 = vector.broadcast %cst_26 : f32 to vector<16x1xf32>
      %c0_27 = arith.constant 0 : index
      %c0_28 = arith.constant 0 : index
      %43 = vector.load %arg8[%c0_27, %c0_28] : memref<16x1xf32, #tpu.memory_space<vmem>>, vector<16x1xf32>
      tpu.vector_store %arg8[%c0_27, %c0_28], %42 {strides = array<i32>} : memref<16x1xf32, #tpu.memory_space<vmem>>, vector<16x1xf32>,
      %cst_29 = arith.constant 0.000000e+00 : f32
      %44 = vector.broadcast %cst_29 : f32 to vector<16x1xf32>
      %c0_30 = arith.constant 0 : index
      %c0_31 = arith.constant 0 : index
      %45 = vector.load %arg9[%c0_30, %c0_31] : memref<16x1xf32, #tpu.memory_space<vmem>>, vector<16x1xf32>
      tpu.vector_store %arg9[%c0_30, %c0_31], %44 {strides = array<i32>} : memref<16x1xf32, #tpu.memory_space<vmem>>, vector<16x1xf32>,
      %cst_32 = arith.constant 0.000000e+00 : f32
      %46 = vector.broadcast %cst_32 : f32 to vector<16x1xf32>
      %c0_33 = arith.constant 0 : index
      %c0_34 = arith.constant 0 : index
      %47 = vector.load %arg10[%c0_33, %c0_34] : memref<16x1xf32, #tpu.memory_space<vmem>>, vector<16x1xf32>
      tpu.vector_store %arg10[%c0_33, %c0_34], %46 {strides = array<i32>} : memref<16x1xf32, #tpu.memory_space<vmem>>, vector<16x1xf32>,
    } else {
    }
    %c0 = arith.constant 0 : index
    %c0_1 = arith.constant 0 : index
    %3 = vector.load %arg2[%c0, %c0_1] : memref<16x32xbf16, #tpu.memory_space<vmem>>, vector<16x32xbf16>
    %c0_2 = arith.constant 0 : index
    %c0_3 = arith.constant 0 : index
    %4 = vector.load %arg3[%c0_2, %c0_3] : memref<32x32xbf16, #tpu.memory_space<vmem>>, vector<32x32xbf16>
    %cst = arith.constant dense<0.000000e+00> : vector<16x32xf32>
    %5 = tpu.matmul %3, %4, %cst {dimension_numbers = #tpu.dot_dimension_numbers<[1], [0], [0], [1], [0, 0, 1, 1], [], []>} : vector<16x32xbf16>, vector<32x32xbf16>, vector<16x32xf32> -> vector<16x32xf32>
    %c0_4 = arith.constant 0 : index
    %c0_5 = arith.constant 0 : index
    %6 = vector.load %arg4[%c0_4, %c0_5] : memref<1x32xf32, #tpu.memory_space<vmem>>, vector<1x32xf32>
    %7 = vector.broadcast %6 : vector<1x32xf32> to vector<16x32xf32>
    %8 = arith.addf %5, %7 : vector<16x32xf32>
    %c0_6 = arith.constant 0 : index
    %c0_7 = arith.constant 0 : index
    %9 = vector.load %arg8[%c0_6, %c0_7] : memref<16x1xf32, #tpu.memory_space<vmem>>, vector<16x1xf32>
    %cst_8 = arith.constant dense<0xFF800000> : vector<16xf32>
    %10 = vector.multi_reduction <maximumf>, %8, %cst_8 [1] : vector<16x32xf32> to vector<16xf32>
    %11 = vector.shape_cast %10 : vector<16xf32> to vector<16x1xf32>
    %12 = arith.maximumf %9, %11 : vector<16x1xf32>
    %c0_9 = arith.constant 0 : index
    %c0_10 = arith.constant 0 : index
    %13 = vector.load %arg9[%c0_9, %c0_10] : memref<16x1xf32, #tpu.memory_space<vmem>>, vector<16x1xf32>
    %14 = arith.subf %9, %12 : vector<16x1xf32>
    %15 = math.exp %14 : vector<16x1xf32>
    %16 = arith.mulf %13, %15 : vector<16x1xf32>
    %17 = vector.broadcast %12 : vector<16x1xf32> to vector<16x32xf32>
    %18 = arith.subf %8, %17 : vector<16x32xf32>
    %19 = math.exp %18 : vector<16x32xf32>
    %cst_11 = arith.constant dense<0.000000e+00> : vector<16xf32>
    %20 = vector.multi_reduction <add>, %19, %cst_11 [1] : vector<16x32xf32> to vector<16xf32>
    %21 = vector.shape_cast %20 : vector<16xf32> to vector<16x1xf32>
    %22 = arith.addf %16, %21 : vector<16x1xf32>
    %c0_12 = arith.constant 0 : index
    %c0_13 = arith.constant 0 : index
    %23 = vector.load %arg9[%c0_12, %c0_13] : memref<16x1xf32, #tpu.memory_space<vmem>>, vector<16x1xf32>
    tpu.vector_store %arg9[%c0_12, %c0_13], %22 {strides = array<i32>} : memref<16x1xf32, #tpu.memory_space<vmem>>, vector<16x1xf32>,
    %c0_14 = arith.constant 0 : index
    %c0_15 = arith.constant 0 : index
    %24 = vector.load %arg8[%c0_14, %c0_15] : memref<16x1xf32, #tpu.memory_space<vmem>>, vector<16x1xf32>
    tpu.vector_store %arg8[%c0_14, %c0_15], %12 {strides = array<i32>} : memref<16x1xf32, #tpu.memory_space<vmem>>, vector<16x1xf32>,
    %25 = tpu.iota {dimensions = array<i32: 1>} : vector<16x32xi32>
    %c32_i32 = arith.constant 32 : i32
    %26 = arith.muli %arg1, %c32_i32 : i32
    %27 = vector.broadcast %26 : i32 to vector<16x32xi32>
    %28 = arith.addi %25, %27 : vector<16x32xi32>
    %c0_16 = arith.constant 0 : index
    %c0_17 = arith.constant 0 : index
    %29 = vector.load %arg10[%c0_16, %c0_17] : memref<16x1xf32, #tpu.memory_space<vmem>>, vector<16x1xf32>
    %c0_18 = arith.constant 0 : index
    %c0_19 = arith.constant 0 : index
    %30 = vector.load %arg5[%c0_18, %c0_19] : memref<16x1xi32, #tpu.memory_space<vmem>>, vector<16x1xi32>
    %31 = vector.broadcast %30 : vector<16x1xi32> to vector<16x32xi32>
    %32 = arith.cmpi eq, %28, %31 : vector<16x32xi32>
    %cst_20 = arith.constant 0.000000e+00 : f32
    %33 = vector.broadcast %cst_20 : f32 to vector<16x32xf32>
    %34 = arith.select %32, %8, %33 : vector<16x32xi1>, vector<16x32xf32>
    %cst_21 = arith.constant dense<0.000000e+00> : vector<16xf32>
    %35 = vector.multi_reduction <add>, %34, %cst_21 [1] : vector<16x32xf32> to vector<16xf32>
    %36 = vector.shape_cast %35 : vector<16xf32> to vector<16x1xf32>
    %37 = arith.addf %29, %36 : vector<16x1xf32>
    %c0_22 = arith.constant 0 : index
    %c0_23 = arith.constant 0 : index
    %38 = vector.load %arg10[%c0_22, %c0_23] : memref<16x1xf32, #tpu.memory_space<vmem>>, vector<16x1xf32>
    tpu.vector_store %arg10[%c0_22, %c0_23], %37 {strides = array<i32>} : memref<16x1xf32, #tpu.memory_space<vmem>>, vector<16x1xf32>,
    %c0_i32_24 = arith.constant 0 : i32
    %39 = arith.cmpi eq, %arg1, %c0_i32_24 : i32
    %40 = arith.extui %39 : i1 to i32
    %c0_i32_25 = arith.constant 0 : i32
    %41 = arith.cmpi ne, %40, %c0_i32_25 : i32
    scf.if %41 {
      %c0_26 = arith.constant 0 : index
      %c0_27 = arith.constant 0 : index
      %42 = vector.load %arg8[%c0_26, %c0_27] : memref<16x1xf32, #tpu.memory_space<vmem>>, vector<16x1xf32>
      %c0_28 = arith.constant 0 : index
      %c0_29 = arith.constant 0 : index
      %43 = vector.load %arg9[%c0_28, %c0_29] : memref<16x1xf32, #tpu.memory_space<vmem>>, vector<16x1xf32>
      %44 = math.log %43 : vector<16x1xf32>
      %45 = arith.addf %42, %44 : vector<16x1xf32>
      %c0_30 = arith.constant 0 : index
      %c0_31 = arith.constant 0 : index
      %46 = vector.load %arg10[%c0_30, %c0_31] : memref<16x1xf32, #tpu.memory_space<vmem>>, vector<16x1xf32>
      %47 = arith.subf %45, %46 : vector<16x1xf32>
      %c0_32 = arith.constant 0 : index
      %c0_33 = arith.constant 0 : index
      %48 = vector.load %arg6[%c0_32, %c0_33] : memref<16x1xf32, #tpu.memory_space<vmem>>, vector<16x1xf32>
      %49 = arith.mulf %47, %48 : vector<16x1xf32>
      %c0_34 = arith.constant 0 : index
      %c0_35 = arith.constant 0 : index
      %50 = vector.load %arg7[%c0_34, %c0_35] : memref<16x1xf32, #tpu.memory_space<vmem>>, vector<16x1xf32>
      tpu.vector_store %arg7[%c0_34, %c0_35], %49 {strides = array<i32>} : memref<16x1xf32, #tpu.memory_space<vmem>>, vector<16x1xf32>,
    } else {
    }
    return
  }
  func.func @transform_0(%arg0: i32, %arg1: i32) -> (i32, i32) {
    %c0_i32 = arith.constant 0 : i32
    %c0_i32_0 = arith.constant 0 : i32
    return %arg0, %c0_i32 : i32, i32
  }
  func.func @transform_1(%arg0: i32, %arg1: i32) -> (i32, i32) {
    %c0_i32 = arith.constant 0 : i32
    %c0_i32_0 = arith.constant 0 : i32
    return %c0_i32, %arg1 : i32, i32
  }
  func.func @transform_2(%arg0: i32, %arg1: i32) -> (i32, i32) {
    %c0_i32 = arith.constant 0 : i32
    %c0_i32_0 = arith.constant 0 : i32
    return %c0_i32, %arg1 : i32, i32
  }
  func.func @transform_3(%arg0: i32, %arg1: i32) -> (i32, i32) {
    %c0_i32 = arith.constant 0 : i32
    %c0_i32_0 = arith.constant 0 : i32
    return %arg0, %c0_i32 : i32, i32
  }
  func.func @transform_4(%arg0: i32, %arg1: i32) -> (i32, i32) {
    %c0_i32 = arith.constant 0 : i32
    %c0_i32_0 = arith.constant 0 : i32
    return %arg0, %c0_i32 : i32, i32
  }
  func.func @transform_5(%arg0: i32, %arg1: i32) -> (i32, i32) {
    %c0_i32 = arith.constant 0 : i32
    %c0_i32_0 = arith.constant 0 : i32
    return %arg0, %c0_i32 : i32, i32
  }
}

</mosaic_0001>

<llo_original>
// kernel: gmvsae_forward.9
$region0: #{gmvsae_forward.9}
  #allocation0 [shape = 'u32[]', space=smem, size = 0x4, offset = 0x4, fixed_abs, tag = 'smem constant byte address 0x4 - core index']
  #allocation1 [shape = 'u32[144,128]{1,0:T(1,128)}', space=vmem, size = 0x12000, scoped, tag = 'internal scratch']
  #allocation2 [shape = 'f32[2,64]{1,0:T(2,128)}', space=vmem, size = 0x400, scoped, tag = 'scratch operand']
  %s0 = inlined_call_operand.vmem [shape: f32[2,32], index: 0, kind: input, shape index: {}]
  %s1 = inlined_call_operand.vmem [shape: f32[32,64], index: 1, kind: input, shape index: {}]
  %s2 = inlined_call_operand.vmem [shape: f32[1,64], index: 2, kind: input, shape index: {}]
  %s3 = inlined_call_operand.vmem [shape: f32[2,64], index: 3, kind: output, shape index: {}]
  %s4 = sld [smem:[#allocation0]]
  $region30: #{gmvsae_forward.9} parent=0
    _
  %s6 = ssub.s32 1, %s4
  %s7 = scalar_select 0, %s6, %s4
  // Predicated region
  $region2: #{gmvsae_forward.9} parent=0 // pred_check
    _
  $region3: #{gmvsae_forward.9} parent=0 // pred_check_branch
    %9 = sbr.rel (0) target = $region5
  $region4: #{gmvsae_forward.9} parent=0 // pred_region
    _
  $region5: #{gmvsae_forward.9} parent=0 // pred_fallthru
    _
  // Predicated region
  $region6: #{gmvsae_forward.9} parent=0 // pred_check
    _
  $region7: #{gmvsae_forward.9} parent=0 // pred_check_branch
    %11 = sbr.rel (0) target = $region9
  $region8: #{gmvsae_forward.9} parent=0 // pred_region
    _
  $region9: #{gmvsae_forward.9} parent=0 // pred_fallthru
    _
  // Predicated region
  $region10: #{gmvsae_forward.9} parent=0 // pred_check
    _
  $region11: #{gmvsae_forward.9} parent=0 // pred_check_branch
    %13 = sbr.rel (0) target = $region13
  $region12: #{gmvsae_forward.9} parent=0 // pred_region
    _
  $region13: #{gmvsae_forward.9} parent=0 // pred_fallthru
    _
  %p14 = scmp.eq.s32.totalorder 0, 0
  // Predicated region
  $region14: #{gmvsae_forward.9} parent=0 // pred_check
    %p15 = pneg %p14
  $region15: #{gmvsae_forward.9} parent=0 // pred_check_branch
    %17 = sbr.rel (%p15) target = $region17
  $region16: #{gmvsae_forward.9} parent=0 // pred_region
    %vm18 = vcmask 517120
    %19 = vst.msk [vmem:[#allocation2] sm:$0x3] %vm18, 0.0
  $region17: #{gmvsae_forward.9} parent=0 // pred_fallthru
    _
  %v20 = vld [vmem:[#allocation2] sm:$0x3]
  %v21 = vld [vmem:[%s0] sm:$0x3]
  %v22 = vld [vmem:[%s1] sm:$0xff]
  %v23 = vld [vmem:[%s1 + $0x8] sm:$0xff]
  %v24 = vld [vmem:[%s1 + $0x10] sm:$0xff]
  %v25 = vld [vmem:[%s1 + $0x18] sm:$0xff]
  %vm26 = vcmask 261120
  %v28 = vsel %vm26, %v21, 0
  %30 = vmatprep.subr.mxu0 0.0
  %31 = vmatpush1.msra.mxu0 %v22
  %32 = vmatprep.subr.mxu0 0.0
  %33 = vmatpush1.msra.mxu0 %v23
  %34 = vmatprep.subr.mxu0 0.0
  %35 = vmatpush1.msra.mxu0 %v24
  %36 = vmatprep.subr.mxu0 0.0
  %37 = vmatpush1.msra.mxu0 %v25
  %38 = vmatprep.subr.mxu0 0.0
  %39 = vmatpush1.msra.mxu0 0.0
  %40 = vmatprep.subr.mxu0 0.0
  %41 = vmatpush1.msra.mxu0 0.0
  %42 = vmatprep.subr.mxu0 0.0
  %43 = vmatpush1.msra.mxu0 0.0
  %44 = vmatprep.subr.mxu0 0.0
  %45 = vmatpush1.msra.mxu0 0.0
  %46 = vmatprep.subr.mxu0 0.0
  %47 = vmatpush1.msra.mxu0 0.0
  %48 = vmatprep.subr.mxu0 0.0
  %49 = vmatpush1.msra.mxu0 0.0
  %50 = vmatprep.subr.mxu0 0.0
  %51 = vmatpush1.msra.mxu0 0.0
  %52 = vmatprep.subr.mxu0 0.0
  %53 = vmatpush1.msra.mxu0 0.0
  %54 = vmatprep.subr.mxu0 0.0
  %55 = vmatpush1.msra.mxu0 0.0
  %56 = vmatprep.subr.mxu0 0.0
  %57 = vmatpush1.msra.mxu0 0.0
  %58 = vmatprep.subr.mxu0 0.0
  %59 = vmatpush1.msra.mxu0 0.0
  %60 = vmatprep.subr.mxu0 0.0
  %61 = vmatpush1.msra.mxu0 0.0
  %62 = vmatprep.subr.mxu0 0.0
  %63 = vmatpush1.msra.mxu0 0.0
  %64 = vmatprep.subr.mxu0 0.0
  %65 = vmatpush1.msra.mxu0 0.0
  %66 = vmatprep.subr.mxu0 0.0
  %67 = vmatpush1.msra.mxu0 0.0
  %68 = vmatprep.subr.mxu0 0.0
  %69 = vmatpush1.msra.mxu0 0.0
  %70 = vmatprep.subr.mxu0 0.0
  %71 = vmatpush1.msra.mxu0 0.0
  %72 = vmatprep.subr.mxu0 0.0
  %73 = vmatpush1.msra.mxu0 0.0
  %74 = vmatprep.subr.mxu0 0.0
  %75 = vmatpush1.msra.mxu0 0.0
  %76 = vmatprep.subr.mxu0 0.0
  %77 = vmatpush1.msra.mxu0 0.0
  %78 = vmatprep.subr.mxu0 0.0
  %79 = vmatpush1.msra.mxu0 0.0
  %80 = vmatprep.subr.mxu0 0.0
  %81 = vmatpush1.msra.mxu0 0.0
  %82 = vmatprep.subr.mxu0 0.0
  %83 = vmatpush1.msra.mxu0 0.0
  %84 = vmatprep.subr.mxu0 0.0
  %85 = vmatpush1.msra.mxu0 0.0
  %86 = vmatprep.subr.mxu0 0.0
  %87 = vmatpush1.msra.mxu0 0.0
  %88 = vmatprep.subr.mxu0 0.0
  %89 = vmatpush1.msra.mxu0 0.0
  %90 = vmatprep.subr.mxu0 0.0
  %91 = vmatpush1.msra.mxu0 0.0
  %92 = vmatprep.subr.mxu0 0.0
  %93 = vmatpush1.msra.mxu0 0.0
  %94 = vmatprep.mubr.f32.mxu0 0.0
  %95 = vmatmul.mubr.f32.gmra.mrb[0].mxu0 %v28
  %v96 = vpop.f32.mrb[0].mxu0
  %v97 = vadd.f32 0.0, %v96
  %v98 = vpop.f32.mrb[0].mxu0
  %99 = vdwg.mxu0
  %v100 = vadd.f32 %v20, %v97
  %vm101 = vcmask 517120
  %102 = vst.msk [vmem:[#allocation2] sm:$0x3] %vm101, %v100
  // Predicated region
  $region18: #{gmvsae_forward.9} parent=0 // pred_check
    %p103 = pneg %p14
  $region19: #{gmvsae_forward.9} parent=0 // pred_check_branch
    %105 = sbr.rel (%p103) target = $region21
  $region20: #{gmvsae_forward.9} parent=0 // pred_region
    %v106 = vld [vmem:[#allocation2] sm:$0x3]
    %v107 = vld [vmem:[%s2] sm:$0x1]
    %v109 = vlaneseq
    %v110 = vshrl.u32 %v109, 7
    %v111 = vsub.s32 0, %v110
    %v112 = vrot.slane %v107, %v111
    %v114 = vadd.f32 %v106, %v112
    %115 = vst.msk [vmem:[%s3] sm:$0x3] %vm101, %v114
  $region21: #{gmvsae_forward.9} parent=0 // pred_fallthru
    _
  // Predicated region
  $region22: #{gmvsae_forward.9} parent=0 // pred_check
    _
  $region23: #{gmvsae_forward.9} parent=0 // pred_check_branch
    %117 = sbr.rel (0) target = $region25
  $region24: #{gmvsae_forward.9} parent=0 // pred_region
    _
  $region25: #{gmvsae_forward.9} parent=0 // pred_fallthru
    _
  // Predicated region
  $region26: #{gmvsae_forward.9} parent=0 // pred_check
    _
  $region27: #{gmvsae_forward.9} parent=0 // pred_check_branch
    %119 = sbr.rel (0) target = $region29
  $region28: #{gmvsae_forward.9} parent=0 // pred_region
    _
  $region29: #{gmvsae_forward.9} parent=0 // pred_fallthru
    _

// kernel: gmvsae_forward.13
$region0: #{gmvsae_forward.13}
  #allocation0 [shape = 'u32[]', space=smem, size = 0x4, offset = 0x4, fixed_abs, tag = 'smem constant byte address 0x4 - core index']
  #allocation1 [shape = 'u32[144,128]{1,0:T(1,128)}', space=vmem, size = 0x12000, scoped, tag = 'internal scratch']
  %s0 = inlined_call_operand.vmem [shape: f32[2,32], index: 0, kind: input, shape index: {}]
  %s1 = inlined_call_operand.vmem [shape: f32[2,32], index: 1, kind: input, shape index: {}]
  %s2 = inlined_call_operand.vmem [shape: f32[2,32], index: 2, kind: input, shape index: {}]
  %s3 = inlined_call_operand.vmem [shape: f32[10,32], index: 3, kind: input, shape index: {}]
  %s4 = inlined_call_operand.vmem [shape: f32[10,32], index: 4, kind: input, shape index: {}]
  %s5 = inlined_call_operand.vmem [shape: f32[1,10], index: 5, kind: input, shape index: {}]
  %s6 = inlined_call_operand.vmem [shape: f32[1,10], index: 6, kind: input, shape index: {}]
  %s7 = inlined_call_operand.vmem [shape: f32[1,10], index: 7, kind: input, shape index: {}]
  %s8 = inlined_call_operand.vmem [shape: f32[2,1], index: 8, kind: output, shape index: {}]
  %s9 = sld [smem:[#allocation0]]
  $region42: #{gmvsae_forward.13} parent=0
    _
  %s11 = ssub.s32 1, %s9
  %s12 = scalar_select 0, %s11, %s9
  // Predicated region
  $region2: #{gmvsae_forward.13} parent=0 // pred_check
    _
  $region3: #{gmvsae_forward.13} parent=0 // pred_check_branch
    %14 = sbr.rel (0) target = $region5
  $region4: #{gmvsae_forward.13} parent=0 // pred_region
    _
  $region5: #{gmvsae_forward.13} parent=0 // pred_fallthru
    _
  // Predicated region
  $region6: #{gmvsae_forward.13} parent=0 // pred_check
    _
  $region7: #{gmvsae_forward.13} parent=0 // pred_check_branch
    %16 = sbr.rel (0) target = $region9
  $region8: #{gmvsae_forward.13} parent=0 // pred_region
    _
  $region9: #{gmvsae_forward.13} parent=0 // pred_fallthru
    _
  // Predicated region
  $region10: #{gmvsae_forward.13} parent=0 // pred_check
    _
  $region11: #{gmvsae_forward.13} parent=0 // pred_check_branch
    %18 = sbr.rel (0) target = $region13
  $region12: #{gmvsae_forward.13} parent=0 // pred_region
    _
  $region13: #{gmvsae_forward.13} parent=0 // pred_fallthru
    _
  // Predicated region
  $region14: #{gmvsae_forward.13} parent=0 // pred_check
    _
  $region15: #{gmvsae_forward.13} parent=0 // pred_check_branch
    %20 = sbr.rel (0) target = $region17
  $region16: #{gmvsae_forward.13} parent=0 // pred_region
    _
  $region17: #{gmvsae_forward.13} parent=0 // pred_fallthru
    _
  // Predicated region
  $region18: #{gmvsae_forward.13} parent=0 // pred_check
    _
  $region19: #{gmvsae_forward.13} parent=0 // pred_check_branch
    %22 = sbr.rel (0) target = $region21
  $region20: #{gmvsae_forward.13} parent=0 // pred_region
    _
  $region21: #{gmvsae_forward.13} parent=0 // pred_fallthru
    _
  // Predicated region
  $region22: #{gmvsae_forward.13} parent=0 // pred_check
    _
  $region23: #{gmvsae_forward.13} parent=0 // pred_check_branch
    %24 = sbr.rel (0) target = $region25
  $region24: #{gmvsae_forward.13} parent=0 // pred_region
    _
  $region25: #{gmvsae_forward.13} parent=0 // pred_fallthru
    _
  // Predicated region
  $region26: #{gmvsae_forward.13} parent=0 // pred_check
    _
  $region27: #{gmvsae_forward.13} parent=0 // pred_check_branch
    %26 = sbr.rel (0) target = $region29
  $region28: #{gmvsae_forward.13} parent=0 // pred_region
    _
  $region29: #{gmvsae_forward.13} parent=0 // pred_fallthru
    _
  // Predicated region
  $region30: #{gmvsae_forward.13} parent=0 // pred_check
    _
  $region31: #{gmvsae_forward.13} parent=0 // pred_check_branch
    %28 = sbr.rel (0) target = $region33
  $region32: #{gmvsae_forward.13} parent=0 // pred_region
    _
  $region33: #{gmvsae_forward.13} parent=0 // pred_fallthru
    _
  %v29 = vld [vmem:[%s0] sm:$0x3]
  %v30 = vld [vmem:[%s1] sm:$0x3]
  %v31 = vld [vmem:[%s2] sm:$0x3]
  %v32 = vld [vmem:[%s3] sm:$0xff]
  %v33 = vld [vmem:[%s3 + $0x8] sm:$0x3]
  %v34 = vld [vmem:[%s4] sm:$0xff]
  %v35 = vld [vmem:[%s4 + $0x8] sm:$0x3]
  %v36 = vld [vmem:[%s5] sm:$0x1]
  %v37 = vld [vmem:[%s6] sm:$0x1]
  %v38 = vld [vmem:[%s7] sm:$0x1]
  %v39 = vmul.f32 %v32, %v34
  %v40 = vmul.f32 %v33, %v35
  %v41 = vadd.f32 %v36, 58.812065
  %v42 = vmul.f32 %v29, %v29
  %vm43 = vcmask 261120
  %v45 = vsel %vm43, %v42, 0
  %v48 = vsel %vm43, %v34, 0
  %v51 = vsel %vm43, %v35, 0
  %53 = vmatprep.subr.mxu0 0.0
  %54 = vmatpush1.xpose.msra.mxu0 %v48
  %55 = vmatprep.subr.mxu0 0.0
  %56 = vmatpush1.xpose.msra.mxu0 %v51
  %57 = vmatprep.subr.mxu0 0.0
  %58 = vmatpush1.xpose.msra.mxu0 0.0
  %59 = vmatprep.subr.mxu0 0.0
  %60 = vmatpush1.xpose.msra.mxu0 0.0
  %61 = vmatprep.subr.mxu0 0.0
  %62 = vmatpush1.xpose.msra.mxu0 0.0
  %63 = vmatprep.subr.mxu0 0.0
  %64 = vmatpush1.xpose.msra.mxu0 0.0
  %65 = vmatprep.subr.mxu0 0.0
  %66 = vmatpush1.xpose.msra.mxu0 0.0
  %67 = vmatprep.subr.mxu0 0.0
  %68 = vmatpush1.xpose.msra.mxu0 0.0
  %69 = vmatprep.subr.mxu0 0.0
  %70 = vmatpush1.xpose.msra.mxu0 0.0
  %71 = vmatprep.subr.mxu0 0.0
  %72 = vmatpush1.xpose.msra.mxu0 0.0
  %73 = vmatprep.subr.mxu0 0.0
  %74 = vmatpush1.xpose.msra.mxu0 0.0
  %75 = vmatprep.subr.mxu0 0.0
  %76 = vmatpush1.xpose.msra.mxu0 0.0
  %77 = vmatprep.subr.mxu0 0.0
  %78 = vmatpush1.xpose.msra.mxu0 0.0
  %79 = vmatprep.subr.mxu0 0.0
  %80 = vmatpush1.xpose.msra.mxu0 0.0
  %81 = vmatprep.subr.mxu0 0.0
  %82 = vmatpush1.xpose.msra.mxu0 0.0
  %83 = vmatprep.subr.mxu0 0.0
  %84 = vmatpush1.xpose.msra.mxu0 0.0
  %85 = vmatprep.subr.mxu0 0.0
  %86 = vmatpush1.xpose.msra.mxu0 0.0
  %87 = vmatprep.subr.mxu0 0.0
  %88 = vmatpush1.xpose.msra.mxu0 0.0
  %89 = vmatprep.subr.mxu0 0.0
  %90 = vmatpush1.xpose.msra.mxu0 0.0
  %91 = vmatprep.subr.mxu0 0.0
  %92 = vmatpush1.xpose.msra.mxu0 0.0
  %93 = vmatprep.subr.mxu0 0.0
  %94 = vmatpush1.xpose.msra.mxu0 0.0
  %95 = vmatprep.subr.mxu0 0.0
  %96 = vmatpush1.xpose.msra.mxu0 0.0
  %97 = vmatprep.subr.mxu0 0.0
  %98 = vmatpush1.xpose.msra.mxu0 0.0
  %99 = vmatprep.subr.mxu0 0.0
  %100 = vmatpush1.xpose.msra.mxu0 0.0
  %101 = vmatprep.subr.mxu0 0.0
  %102 = vmatpush1.xpose.msra.mxu0 0.0
  %103 = vmatprep.subr.mxu0 0.0
  %104 = vmatpush1.xpose.msra.mxu0 0.0
  %105 = vmatprep.subr.mxu0 0.0
  %106 = vmatpush1.xpose.msra.mxu0 0.0
  %107 = vmatprep.subr.mxu0 0.0
  %108 = vmatpush1.xpose.msra.mxu0 0.0
  %109 = vmatprep.subr.mxu0 0.0
  %110 = vmatpush1.xpose.msra.mxu0 0.0
  %111 = vmatprep.subr.mxu0 0.0
  %112 = vmatpush1.xpose.msra.mxu0 0.0
  %113 = vmatprep.subr.mxu0 0.0
  %114 = vmatpush1.xpose.msra.mxu0 0.0
  %115 = vmatprep.subr.mxu0 0.0
  %116 = vmatpush1.xpose.msra.mxu0 0.0
  %117 = vmatprep.mubr.f32.mxu0 0.0
  %118 = vmatmul.mubr.f32.gmra.mrb[0].mxu0 %v45
  %v119 = vpop.f32.mrb[0].mxu0
  %v120 = vadd.f32 0.0, %v119
  %v121 = vpop.f32.mrb[0].mxu0
  %122 = vdwg.mxu0
  %v124 = vsel %vm43, %v29, 0
  %v127 = vsel %vm43, %v39, 0
  %v130 = vsel %vm43, %v40, 0
  %132 = vmatprep.subr.mxu0 0.0
  %133 = vmatpush1.xpose.msra.mxu0 %v127
  %134 = vmatprep.subr.mxu0 0.0
  %135 = vmatpush1.xpose.msra.mxu0 %v130
  %136 = vmatprep.subr.mxu0 0.0
  %137 = vmatpush1.xpose.msra.mxu0 0.0
  %138 = vmatprep.subr.mxu0 0.0
  %139 = vmatpush1.xpose.msra.mxu0 0.0
  %140 = vmatprep.subr.mxu0 0.0
  %141 = vmatpush1.xpose.msra.mxu0 0.0
  %142 = vmatprep.subr.mxu0 0.0
  %143 = vmatpush1.xpose.msra.mxu0 0.0
  %144 = vmatprep.subr.mxu0 0.0
  %145 = vmatpush1.xpose.msra.mxu0 0.0
  %146 = vmatprep.subr.mxu0 0.0
  %147 = vmatpush1.xpose.msra.mxu0 0.0
  %148 = vmatprep.subr.mxu0 0.0
  %149 = vmatpush1.xpose.msra.mxu0 0.0
  %150 = vmatprep.subr.mxu0 0.0
  %151 = vmatpush1.xpose.msra.mxu0 0.0
  %152 = vmatprep.subr.mxu0 0.0
  %153 = vmatpush1.xpose.msra.mxu0 0.0
  %154 = vmatprep.subr.mxu0 0.0
  %155 = vmatpush1.xpose.msra.mxu0 0.0
  %156 = vmatprep.subr.mxu0 0.0
  %157 = vmatpush1.xpose.msra.mxu0 0.0
  %158 = vmatprep.subr.mxu0 0.0
  %159 = vmatpush1.xpose.msra.mxu0 0.0
  %160 = vmatprep.subr.mxu0 0.0
  %161 = vmatpush1.xpose.msra.mxu0 0.0
  %162 = vmatprep.subr.mxu0 0.0
  %163 = vmatpush1.xpose.msra.mxu0 0.0
  %164 = vmatprep.subr.mxu0 0.0
  %165 = vmatpush1.xpose.msra.mxu0 0.0
  %166 = vmatprep.subr.mxu0 0.0
  %167 = vmatpush1.xpose.msra.mxu0 0.0
  %168 = vmatprep.subr.mxu0 0.0
  %169 = vmatpush1.xpose.msra.mxu0 0.0
  %170 = vmatprep.subr.mxu0 0.0
  %171 = vmatpush1.xpose.msra.mxu0 0.0
  %172 = vmatprep.subr.mxu0 0.0
  %173 = vmatpush1.xpose.msra.mxu0 0.0
  %174 = vmatprep.subr.mxu0 0.0
  %175 = vmatpush1.xpose.msra.mxu0 0.0
  %176 = vmatprep.subr.mxu0 0.0
  %177 = vmatpush1.xpose.msra.mxu0 0.0
  %178 = vmatprep.subr.mxu0 0.0
  %179 = vmatpush1.xpose.msra.mxu0 0.0
  %180 = vmatprep.subr.mxu0 0.0
  %181 = vmatpush1.xpose.msra.mxu0 0.0
  %182 = vmatprep.subr.mxu0 0.0
  %183 = vmatpush1.xpose.msra.mxu0 0.0
  %184 = vmatprep.subr.mxu0 0.0
  %185 = vmatpush1.xpose.msra.mxu0 0.0
  %186 = vmatprep.subr.mxu0 0.0
  %187 = vmatpush1.xpose.msra.mxu0 0.0
  %188 = vmatprep.subr.mxu0 0.0
  %189 = vmatpush1.xpose.msra.mxu0 0.0
  %190 = vmatprep.subr.mxu0 0.0
  %191 = vmatpush1.xpose.msra.mxu0 0.0
  %192 = vmatprep.subr.mxu0 0.0
  %193 = vmatpush1.xpose.msra.mxu0 0.0
  %194 = vmatprep.subr.mxu0 0.0
  %195 = vmatpush1.xpose.msra.mxu0 0.0
  %196 = vmatprep.mubr.f32.mxu0 0.0
  %197 = vmatmul.mubr.f32.gmra.mrb[0].mxu0 %v124
  %v198 = vpop.f32.mrb[0].mxu0
  %v199 = vadd.f32 0.0, %v198
  %v200 = vpop.f32.mrb[0].mxu0
  %201 = vdwg.mxu0
  %v202 = vmul.f32 %v199, 2.0
  %v203 = vsub.f32 %v120, %v202
  %v205 = vlaneseq
  %v206 = vshrl.u32 %v205, 7
  %v207 = vsub.s32 0, %v206
  %v208 = vrot.slane %v37, %v207
  %v210 = vadd.f32 %v203, %v208
  %v212 = vlaneseq
  %v213 = vshrl.u32 %v212, 7
  %v214 = vsub.s32 0, %v213
  %v215 = vrot.slane %v41, %v214
  %v217 = vadd.f32 %v215, %v210
  %v218 = vmul.f32 %v217, -0.5
  %v220 = vlaneseq
  %v221 = vshrl.u32 %v220, 7
  %v222 = vsub.s32 0, %v221
  %v223 = vrot.slane %v38, %v222
  %v225 = vadd.f32 %v223, %v218
  %vm226 = vcmask 74752
  %v227 = vsel %vm226, %v225, -inf
  %228 = vmax.xlane.f32.xlu0 %v227
  %v229 = vpop.xlane.xlu0 %228
  %v230 = vsub.f32 %v225, %v229
  %v231 = vmul.f32 %v230, 1.442695
  %v232 = vpow.pop %v231
  %v233 = vsel %vm226, %v232, 0.0
  %234 = vadd.xlane.f32.xlu0 %v233
  %v235 = vpop.xlane.xlu0 %234
  %v236 = vrcp.pop %v235
  %v237 = vmul.f32 %v232, %v236
  %v238 = vmul.f32 %v31, 1.442695
  %v239 = vpow.pop %v238
  %v241 = vsel %vm43, %v239, 0
  %243 = vmatprep.subr.mxu0 0.0
  %244 = vmatpush1.xpose.msra.mxu0 %v48
  %245 = vmatprep.subr.mxu0 0.0
  %246 = vmatpush1.xpose.msra.mxu0 %v51
  %247 = vmatprep.subr.mxu0 0.0
  %248 = vmatpush1.xpose.msra.mxu0 0.0
  %249 = vmatprep.subr.mxu0 0.0
  %250 = vmatpush1.xpose.msra.mxu0 0.0
  %251 = vmatprep.subr.mxu0 0.0
  %252 = vmatpush1.xpose.msra.mxu0 0.0
  %253 = vmatprep.subr.mxu0 0.0
  %254 = vmatpush1.xpose.msra.mxu0 0.0
  %255 = vmatprep.subr.mxu0 0.0
  %256 = vmatpush1.xpose.msra.mxu0 0.0
  %257 = vmatprep.subr.mxu0 0.0
  %258 = vmatpush1.xpose.msra.mxu0 0.0
  %259 = vmatprep.subr.mxu0 0.0
  %260 = vmatpush1.xpose.msra.mxu0 0.0
  %261 = vmatprep.subr.mxu0 0.0
  %262 = vmatpush1.xpose.msra.mxu0 0.0
  %263 = vmatprep.subr.mxu0 0.0
  %264 = vmatpush1.xpose.msra.mxu0 0.0
  %265 = vmatprep.subr.mxu0 0.0
  %266 = vmatpush1.xpose.msra.mxu0 0.0
  %267 = vmatprep.subr.mxu0 0.0
  %268 = vmatpush1.xpose.msra.mxu0 0.0
  %269 = vmatprep.subr.mxu0 0.0
  %270 = vmatpush1.xpose.msra.mxu0 0.0
  %271 = vmatprep.subr.mxu0 0.0
  %272 = vmatpush1.xpose.msra.mxu0 0.0
  %273 = vmatprep.subr.mxu0 0.0
  %274 = vmatpush1.xpose.msra.mxu0 0.0
  %275 = vmatprep.subr.mxu0 0.0
  %276 = vmatpush1.xpose.msra.mxu0 0.0
  %277 = vmatprep.subr.mxu0 0.0
  %278 = vmatpush1.xpose.msra.mxu0 0.0
  %279 = vmatprep.subr.mxu0 0.0
  %280 = vmatpush1.xpose.msra.mxu0 0.0
  %281 = vmatprep.subr.mxu0 0.0
  %282 = vmatpush1.xpose.msra.mxu0 0.0
  %283 = vmatprep.subr.mxu0 0.0
  %284 = vmatpush1.xpose.msra.mxu0 0.0
  %285 = vmatprep.subr.mxu0 0.0
  %286 = vmatpush1.xpose.msra.mxu0 0.0
  %287 = vmatprep.subr.mxu0 0.0
  %288 = vmatpush1.xpose.msra.mxu0 0.0
  %289 = vmatprep.subr.mxu0 0.0
  %290 = vmatpush1.xpose.msra.mxu0 0.0
  %291 = vmatprep.subr.mxu0 0.0
  %292 = vmatpush1.xpose.msra.mxu0 0.0
  %293 = vmatprep.subr.mxu0 0.0
  %294 = vmatpush1.xpose.msra.mxu0 0.0
  %295 = vmatprep.subr.mxu0 0.0
  %296 = vmatpush1.xpose.msra.mxu0 0.0
  %297 = vmatprep.subr.mxu0 0.0
  %298 = vmatpush1.xpose.msra.mxu0 0.0
  %299 = vmatprep.subr.mxu0 0.0
  %300 = vmatpush1.xpose.msra.mxu0 0.0
  %301 = vmatprep.subr.mxu0 0.0
  %302 = vmatpush1.xpose.msra.mxu0 0.0
  %303 = vmatprep.subr.mxu0 0.0
  %304 = vmatpush1.xpose.msra.mxu0 0.0
  %305 = vmatprep.subr.mxu0 0.0
  %306 = vmatpush1.xpose.msra.mxu0 0.0
  %307 = vmatprep.mubr.f32.mxu0 0.0
  %308 = vmatmul.mubr.f32.gmra.mrb[0].mxu0 %v241
  %v309 = vpop.f32.mrb[0].mxu0
  %v310 = vadd.f32 0.0, %v309
  %v311 = vpop.f32.mrb[0].mxu0
  %312 = vdwg.mxu0
  %v314 = vlaneseq
  %v315 = vshrl.u32 %v314, 7
  %v316 = vsub.s32 0, %v315
  %v317 = vrot.slane %v36, %v316
  %v319 = vadd.f32 %v317, %v310
  %v320 = vmul.f32 %v30, %v30
  %v322 = vsel %vm43, %v320, 0
  %324 = vmatprep.subr.mxu0 0.0
  %325 = vmatpush1.xpose.msra.mxu0 %v48
  %326 = vmatprep.subr.mxu0 0.0
  %327 = vmatpush1.xpose.msra.mxu0 %v51
  %328 = vmatprep.subr.mxu0 0.0
  %329 = vmatpush1.xpose.msra.mxu0 0.0
  %330 = vmatprep.subr.mxu0 0.0
  %331 = vmatpush1.xpose.msra.mxu0 0.0
  %332 = vmatprep.subr.mxu0 0.0
  %333 = vmatpush1.xpose.msra.mxu0 0.0
  %334 = vmatprep.subr.mxu0 0.0
  %335 = vmatpush1.xpose.msra.mxu0 0.0
  %336 = vmatprep.subr.mxu0 0.0
  %337 = vmatpush1.xpose.msra.mxu0 0.0
  %338 = vmatprep.subr.mxu0 0.0
  %339 = vmatpush1.xpose.msra.mxu0 0.0
  %340 = vmatprep.subr.mxu0 0.0
  %341 = vmatpush1.xpose.msra.mxu0 0.0
  %342 = vmatprep.subr.mxu0 0.0
  %343 = vmatpush1.xpose.msra.mxu0 0.0
  %344 = vmatprep.subr.mxu0 0.0
  %345 = vmatpush1.xpose.msra.mxu0 0.0
  %346 = vmatprep.subr.mxu0 0.0
  %347 = vmatpush1.xpose.msra.mxu0 0.0
  %348 = vmatprep.subr.mxu0 0.0
  %349 = vmatpush1.xpose.msra.mxu0 0.0
  %350 = vmatprep.subr.mxu0 0.0
  %351 = vmatpush1.xpose.msra.mxu0 0.0
  %352 = vmatprep.subr.mxu0 0.0
  %353 = vmatpush1.xpose.msra.mxu0 0.0
  %354 = vmatprep.subr.mxu0 0.0
  %355 = vmatpush1.xpose.msra.mxu0 0.0
  %356 = vmatprep.subr.mxu0 0.0
  %357 = vmatpush1.xpose.msra.mxu0 0.0
  %358 = vmatprep.subr.mxu0 0.0
  %359 = vmatpush1.xpose.msra.mxu0 0.0
  %360 = vmatprep.subr.mxu0 0.0
  %361 = vmatpush1.xpose.msra.mxu0 0.0
  %362 = vmatprep.subr.mxu0 0.0
  %363 = vmatpush1.xpose.msra.mxu0 0.0
  %364 = vmatprep.subr.mxu0 0.0
  %365 = vmatpush1.xpose.msra.mxu0 0.0
  %366 = vmatprep.subr.mxu0 0.0
  %367 = vmatpush1.xpose.msra.mxu0 0.0
  %368 = vmatprep.subr.mxu0 0.0
  %369 = vmatpush1.xpose.msra.mxu0 0.0
  %370 = vmatprep.subr.mxu0 0.0
  %371 = vmatpush1.xpose.msra.mxu0 0.0
  %372 = vmatprep.subr.mxu0 0.0
  %373 = vmatpush1.xpose.msra.mxu0 0.0
  %374 = vmatprep.subr.mxu0 0.0
  %375 = vmatpush1.xpose.msra.mxu0 0.0
  %376 = vmatprep.subr.mxu0 0.0
  %377 = vmatpush1.xpose.msra.mxu0 0.0
  %378 = vmatprep.subr.mxu0 0.0
  %379 = vmatpush1.xpose.msra.mxu0 0.0
  %380 = vmatprep.subr.mxu0 0.0
  %381 = vmatpush1.xpose.msra.mxu0 0.0
  %382 = vmatprep.subr.mxu0 0.0
  %383 = vmatpush1.xpose.msra.mxu0 0.0
  %384 = vmatprep.subr.mxu0 0.0
  %385 = vmatpush1.xpose.msra.mxu0 0.0
  %386 = vmatprep.subr.mxu0 0.0
  %387 = vmatpush1.xpose.msra.mxu0 0.0
  %388 = vmatprep.mubr.f32.mxu0 0.0
  %389 = vmatmul.mubr.f32.gmra.mrb[0].mxu0 %v322
  %v390 = vpop.f32.mrb[0].mxu0
  %v391 = vadd.f32 0.0, %v390
  %v392 = vpop.f32.mrb[0].mxu0
  %393 = vdwg.mxu0
  %v395 = vsel %vm43, %v30, 0
  %397 = vmatprep.subr.mxu0 0.0
  %398 = vmatpush1.xpose.msra.mxu0 %v127
  %399 = vmatprep.subr.mxu0 0.0
  %400 = vmatpush1.xpose.msra.mxu0 %v130
  %401 = vmatprep.subr.mxu0 0.0
  %402 = vmatpush1.xpose.msra.mxu0 0.0
  %403 = vmatprep.subr.mxu0 0.0
  %404 = vmatpush1.xpose.msra.mxu0 0.0
  %405 = vmatprep.subr.mxu0 0.0
  %406 = vmatpush1.xpose.msra.mxu0 0.0
  %407 = vmatprep.subr.mxu0 0.0
  %408 = vmatpush1.xpose.msra.mxu0 0.0
  %409 = vmatprep.subr.mxu0 0.0
  %410 = vmatpush1.xpose.msra.mxu0 0.0
  %411 = vmatprep.subr.mxu0 0.0
  %412 = vmatpush1.xpose.msra.mxu0 0.0
  %413 = vmatprep.subr.mxu0 0.0
  %414 = vmatpush1.xpose.msra.mxu0 0.0
  %415 = vmatprep.subr.mxu0 0.0
  %416 = vmatpush1.xpose.msra.mxu0 0.0
  %417 = vmatprep.subr.mxu0 0.0
  %418 = vmatpush1.xpose.msra.mxu0 0.0
  %419 = vmatprep.subr.mxu0 0.0
  %420 = vmatpush1.xpose.msra.mxu0 0.0
  %421 = vmatprep.subr.mxu0 0.0
  %422 = vmatpush1.xpose.msra.mxu0 0.0
  %423 = vmatprep.subr.mxu0 0.0
  %424 = vmatpush1.xpose.msra.mxu0 0.0
  %425 = vmatprep.subr.mxu0 0.0
  %426 = vmatpush1.xpose.msra.mxu0 0.0
  %427 = vmatprep.subr.mxu0 0.0
  %428 = vmatpush1.xpose.msra.mxu0 0.0
  %429 = vmatprep.subr.mxu0 0.0
  %430 = vmatpush1.xpose.msra.mxu0 0.0
  %431 = vmatprep.subr.mxu0 0.0
  %432 = vmatpush1.xpose.msra.mxu0 0.0
  %433 = vmatprep.subr.mxu0 0.0
  %434 = vmatpush1.xpose.msra.mxu0 0.0
  %435 = vmatprep.subr.mxu0 0.0
  %436 = vmatpush1.xpose.msra.mxu0 0.0
  %437 = vmatprep.subr.mxu0 0.0
  %438 = vmatpush1.xpose.msra.mxu0 0.0
  %439 = vmatprep.subr.mxu0 0.0
  %440 = vmatpush1.xpose.msra.mxu0 0.0
  %441 = vmatprep.subr.mxu0 0.0
  %442 = vmatpush1.xpose.msra.mxu0 0.0
  %443 = vmatprep.subr.mxu0 0.0
  %444 = vmatpush1.xpose.msra.mxu0 0.0
  %445 = vmatprep.subr.mxu0 0.0
  %446 = vmatpush1.xpose.msra.mxu0 0.0
  %447 = vmatprep.subr.mxu0 0.0
  %448 = vmatpush1.xpose.msra.mxu0 0.0
  %449 = vmatprep.subr.mxu0 0.0
  %450 = vmatpush1.xpose.msra.mxu0 0.0
  %451 = vmatprep.subr.mxu0 0.0
  %452 = vmatpush1.xpose.msra.mxu0 0.0
  %453 = vmatprep.subr.mxu0 0.0
  %454 = vmatpush1.xpose.msra.mxu0 0.0
  %455 = vmatprep.subr.mxu0 0.0
  %456 = vmatpush1.xpose.msra.mxu0 0.0
  %457 = vmatprep.subr.mxu0 0.0
  %458 = vmatpush1.xpose.msra.mxu0 0.0
  %459 = vmatprep.subr.mxu0 0.0
  %460 = vmatpush1.xpose.msra.mxu0 0.0
  %461 = vmatprep.mubr.f32.mxu0 0.0
  %462 = vmatmul.mubr.f32.gmra.mrb[0].mxu0 %v395
  %v463 = vpop.f32.mrb[0].mxu0
  %v464 = vadd.f32 0.0, %v463
  %v465 = vpop.f32.mrb[0].mxu0
  %466 = vdwg.mxu0
  %v467 = vmul.f32 %v464, 2.0
  %v468 = vsub.f32 %v391, %v467
  %v469 = vadd.f32 %v468, %v208
  %v470 = vadd.f32 %v319, %v469
  %v471 = vmul.f32 %v470, 0.5
  %v472 = vmul.f32 %v237, %v471
  %v473 = vsel %vm226, %v472, 0.0
  %474 = vadd.xlane.f32.xlu0 %v473
  %v475 = vpop.xlane.xlu0 %474
  %v476 = vadd.f32 %v31, 1.0
  %vm477 = vcmask 254976
  %v478 = vsel %vm477, %v476, 0.0
  %479 = vadd.xlane.f32.xlu0 %v478
  %v480 = vpop.xlane.xlu0 %479
  %v481 = vmul.f32 %v480, 0.5
  %v482 = vsub.f32 %v475, %v481
  %v483 = vadd.f32 %v237, 1e-10
  %v484 = vlog2.pop %v483
  %v485 = vmul.f32 %v484, 0.6931472
  %v486 = vsub.f32 %v485, %v223
  %v487 = vmul.f32 %v237, %v486
  %v488 = vsel %vm226, %v487, 0.0
  %489 = vadd.xlane.f32.xlu0 %v488
  %v490 = vpop.xlane.xlu0 %489
  %v491 = vadd.f32 %v482, %v490
  %vm492 = vcmask 1024
  %493 = vst.msk [vmem:[%s8] sm:$0x3] %vm492, %v491
  // Predicated region
  $region34: #{gmvsae_forward.13} parent=0 // pred_check
    _
  $region35: #{gmvsae_forward.13} parent=0 // pred_check_branch
    %495 = sbr.rel (0) target = $region37
  $region36: #{gmvsae_forward.13} parent=0 // pred_region
    _
  $region37: #{gmvsae_forward.13} parent=0 // pred_fallthru
    _
  // Predicated region
  $region38: #{gmvsae_forward.13} parent=0 // pred_check
    _
  $region39: #{gmvsae_forward.13} parent=0 // pred_check_branch
    %497 = sbr.rel (0) target = $region41
  $region40: #{gmvsae_forward.13} parent=0 // pred_region
    _
  $region41: #{gmvsae_forward.13} parent=0 // pred_fallthru
    _

// kernel: squeeze.4
$region0: #{squeeze.4}
  %s0 = inlined_call_operand.vmem [shape: f32[16], index: 0, kind: input, shape index: {}]
  %s1 = inlined_call_operand.vmem [shape: f32[2,8], index: 1, kind: output, shape index: {}]
  $region1: #{squeeze.4} parent=0
    #allocation0 [shape = 'u8[4096]{0}', space=vmem, size = 0x1000, scoped, tag = 'scoped mem for output reshape']
    #allocation1 [shape = 'u8[4096]{0}', space=vmem, size = 0x1000, scoped, tag = 'scoped mem for input reshape']
    %s3 = sshllo.u32 0, 1
    %v4 = vld [vmem:[%s0] sm:%s3]
    %5 = vst [vmem:[#allocation1] sm:%s3] %v4
    %v6 = vld [vmem:[#allocation1] sm:$0x1]
    %vm7 = vcmask 64512
    %8 = vst.msk [vmem:[#allocation0] sm:$0x1] %vm7, %v6
    %v9 = vld [vmem:[#allocation1] sm:$0x1]
    %10 = vrot.lane.b32.xlu0 %v9, 120
    %v11 = vpop.permute.xlu0 %10
    %vm12 = vcmask 64512
    %s13 = scalar_lea.vmem [#allocation0], 1
    %14 = vst.msk [vmem:[%s13] sm:$0x1] %vm12, %v11
    %s16 = sshllo.u32 0, 2
    %v18 = vld [vmem:[#allocation0] sm:%s16]
    %s19 = sshllo.u32 0, 2
    %20 = vst [vmem:[%s1] sm:%s19] %v18

// kernel: gmvsae_forward.12
$region0: #{gmvsae_forward.12}
  #allocation0 [shape = 'u32[]', space=smem, size = 0x4, offset = 0x4, fixed_abs, tag = 'smem constant byte address 0x4 - core index']
  #allocation1 [shape = 'u32[144,128]{1,0:T(1,128)}', space=vmem, size = 0x12000, scoped, tag = 'internal scratch']
  #allocation2 [shape = 'f32[16,1]{1,0:T(8,128)}', space=vmem, size = 0x2000, scoped, tag = 'scratch operand']
  #allocation3 [shape = 'f32[16,1]{1,0:T(8,128)}', space=vmem, size = 0x2000, scoped, tag = 'scratch operand']
  #allocation4 [shape = 'f32[16,1]{1,0:T(8,128)}', space=vmem, size = 0x2000, scoped, tag = 'scratch operand']
  %s0 = inlined_call_operand.vmem [shape: bf16[16,32], index: 0, kind: input, shape index: {}]
  %s1 = inlined_call_operand.vmem [shape: bf16[32,32], index: 1, kind: input, shape index: {}]
  %s2 = inlined_call_operand.vmem [shape: f32[1,32], index: 2, kind: input, shape index: {}]
  %s3 = inlined_call_operand.vmem [shape: s32[16,1], index: 3, kind: input, shape index: {}]
  %s4 = inlined_call_operand.vmem [shape: f32[16,1], index: 4, kind: input, shape index: {}]
  %s5 = inlined_call_operand.vmem [shape: f32[16,1], index: 5, kind: output, shape index: {}]
  %s6 = sld [smem:[#allocation0]]
  $region38: #{gmvsae_forward.12} parent=0
    _
  %s8 = ssub.s32 1, %s6
  %s9 = scalar_select 0, %s8, %s6
  // Predicated region
  $region2: #{gmvsae_forward.12} parent=0 // pred_check
    _
  $region3: #{gmvsae_forward.12} parent=0 // pred_check_branch
    %11 = sbr.rel (0) target = $region5
  $region4: #{gmvsae_forward.12} parent=0 // pred_region
    _
  $region5: #{gmvsae_forward.12} parent=0 // pred_fallthru
    _
  // Predicated region
  $region6: #{gmvsae_forward.12} parent=0 // pred_check
    _
  $region7: #{gmvsae_forward.12} parent=0 // pred_check_branch
    %13 = sbr.rel (0) target = $region9
  $region8: #{gmvsae_forward.12} parent=0 // pred_region
    _
  $region9: #{gmvsae_forward.12} parent=0 // pred_fallthru
    _
  // Predicated region
  $region10: #{gmvsae_forward.12} parent=0 // pred_check
    _
  $region11: #{gmvsae_forward.12} parent=0 // pred_check_branch
    %15 = sbr.rel (0) target = $region13
  $region12: #{gmvsae_forward.12} parent=0 // pred_region
    _
  $region13: #{gmvsae_forward.12} parent=0 // pred_fallthru
    _
  // Predicated region
  $region14: #{gmvsae_forward.12} parent=0 // pred_check
    _
  $region15: #{gmvsae_forward.12} parent=0 // pred_check_branch
    %17 = sbr.rel (0) target = $region17
  $region16: #{gmvsae_forward.12} parent=0 // pred_region
    _
  $region17: #{gmvsae_forward.12} parent=0 // pred_fallthru
    _
  // Predicated region
  $region18: #{gmvsae_forward.12} parent=0 // pred_check
    _
  $region19: #{gmvsae_forward.12} parent=0 // pred_check_branch
    %19 = sbr.rel (0) target = $region21
  $region20: #{gmvsae_forward.12} parent=0 // pred_region
    _
  $region21: #{gmvsae_forward.12} parent=0 // pred_fallthru
    _
  %p21 = scmp.eq.s32.totalorder 0, 0
  // Predicated region
  $region22: #{gmvsae_forward.12} parent=0 // pred_check
    %p22 = pneg %p21
  $region23: #{gmvsae_forward.12} parent=0 // pred_check_branch
    %24 = sbr.rel (%p22) target = $region25
  $region24: #{gmvsae_forward.12} parent=0 // pred_region
    %vm25 = vcmask 7168
    %26 = vst.msk [vmem:[#allocation2] sm:$0xff] %vm25, -inf
    %27 = vst.msk [vmem:[#allocation2 + $0x8] sm:$0xff] %vm25, -inf
    %28 = vst.msk [vmem:[#allocation3] sm:$0xff] %vm25, 0.0
    %29 = vst.msk [vmem:[#allocation3 + $0x8] sm:$0xff] %vm25, 0.0
    %30 = vst.msk [vmem:[#allocation4] sm:$0xff] %vm25, 0.0
    %31 = vst.msk [vmem:[#allocation4 + $0x8] sm:$0xff] %vm25, 0.0
  $region25: #{gmvsae_forward.12} parent=0 // pred_fallthru
    _
  %v32 = vld [vmem:[%s0] sm:$0xf]
  %v33 = vld [vmem:[%s0 + $0x4] sm:$0xf]
  %v34 = vld [vmem:[%s1] sm:$0xf]
  %v35 = vld [vmem:[%s1 + $0x4] sm:$0xf]
  %v36 = vld [vmem:[%s1 + $0x8] sm:$0xf]
  %v37 = vld [vmem:[%s1 + $0xc] sm:$0xf]
  %v38 = vld [vmem:[%s2] sm:$0x1]
  %v40 = vlaneseq
  %v41 = vshrl.u32 %v40, 7
  %v42 = vsub.s32 0, %v41
  %v43 = vrot.slane %v38, %v42
  %v47 = vunpack.c.l.b16 %v32
  %v48 = vunpack.c.l.b16 %v33
  %v49 = vpack.c.b16 %v48, %v47
  %v54 = vunpack.c.l.b16 %v34
  %v55 = vunpack.c.l.b16 %v35
  %v56 = vunpack.c.l.b16 %v36
  %v57 = vunpack.c.l.b16 %v37
  %v58 = vpack.c.b16 %v55, %v54
  %v59 = vpack.c.b16 %v57, %v56
  %vm62 = vcmask 261120
  %v64 = vsel %vm62, %v49, 0
  %66 = vmatprep.subr.bf16.mxu0 0
  %67 = vmatpush1.bf16.msra.mxu0 %v58
  %68 = vmatprep.subr.bf16.mxu0 0
  %69 = vmatpush1.bf16.msra.mxu0 %v59
  %70 = vmatprep.subr.bf16.mxu0 0
  %71 = vmatpush1.bf16.msra.mxu0 0
  %72 = vmatprep.subr.bf16.mxu0 0
  %73 = vmatpush1.bf16.msra.mxu0 0
  %74 = vmatprep.subr.bf16.mxu0 0
  %75 = vmatpush1.bf16.msra.mxu0 0
  %76 = vmatprep.subr.bf16.mxu0 0
  %77 = vmatpush1.bf16.msra.mxu0 0
  %78 = vmatprep.subr.bf16.mxu0 0
  %79 = vmatpush1.bf16.msra.mxu0 0
  %80 = vmatprep.subr.bf16.mxu0 0
  %81 = vmatpush1.bf16.msra.mxu0 0
  %82 = vmatprep.subr.bf16.mxu0 0
  %83 = vmatpush1.bf16.msra.mxu0 0
  %84 = vmatprep.subr.bf16.mxu0 0
  %85 = vmatpush1.bf16.msra.mxu0 0
  %86 = vmatprep.subr.bf16.mxu0 0
  %87 = vmatpush1.bf16.msra.mxu0 0
  %88 = vmatprep.subr.bf16.mxu0 0
  %89 = vmatpush1.bf16.msra.mxu0 0
  %90 = vmatprep.subr.bf16.mxu0 0
  %91 = vmatpush1.bf16.msra.mxu0 0
  %92 = vmatprep.subr.bf16.mxu0 0
  %93 = vmatpush1.bf16.msra.mxu0 0
  %94 = vmatprep.subr.bf16.mxu0 0
  %95 = vmatpush1.bf16.msra.mxu0 0
  %96 = vmatprep.subr.bf16.mxu0 0
  %97 = vmatpush1.bf16.msra.mxu0 0
  %98 = vmatprep.mubr.bf16.mxu0 0
  %99 = vmatmul.mubr.bf16.gmra.mrb[0].mxu0 %v64
  %v100 = vpop.f32.mrb[0].mxu0
  %v101 = vadd.f32 %v43, %v100
  %v102 = vpop.f32.mrb[0].mxu0
  %v103 = vpop.f32.mrb[0].mxu0
  %v104 = vadd.f32 %v43, %v103
  %v105 = vpop.f32.mrb[0].mxu0
  %106 = vdwg.mxu0
  %v107 = vld [vmem:[#allocation2] sm:$0xff]
  %v108 = vld [vmem:[#allocation2 + $0x8] sm:$0xff]
  %v109 = vsel %vm62, %v101, -inf
  %110 = vmax.xlane.f32.xlu0 %v109
  %v111 = vpop.xlane.xlu0 %110
  %v112 = vsel %vm62, %v104, -inf
  %113 = vmax.xlane.f32.xlu0 %v112
  %v114 = vpop.xlane.xlu0 %113
  %v115 = vmax.f32 %v107, %v111
  %v116 = vmax.f32 %v108, %v114
  %v117 = vld [vmem:[#allocation3] sm:$0xff]
  %v118 = vld [vmem:[#allocation3 + $0x8] sm:$0xff]
  %v119 = vsub.f32 %v107, %v115
  %v120 = vsub.f32 %v108, %v116
  %v121 = vmul.f32 %v119, 1.442695
  %v122 = vpow.pop %v121
  %v123 = vmul.f32 %v120, 1.442695
  %v124 = vpow.pop %v123
  %v125 = vmul.f32 %v117, %v122
  %v126 = vmul.f32 %v118, %v124
  %128 = vset.pattern.permute.xlu0 0
  %129 = vperm.xlu0 %128, %v115
  %v130 = vpop.permute.xlu0 %129
  %133 = vset.pattern.permute.xlu0 0
  %134 = vperm.xlu0 %133, %v116
  %v135 = vpop.permute.xlu0 %134
  %v137 = vsub.f32 %v101, %v130
  %v138 = vsub.f32 %v104, %v135
  %v139 = vmul.f32 %v137, 1.442695
  %v140 = vpow.pop %v139
  %v141 = vmul.f32 %v138, 1.442695
  %v142 = vpow.pop %v141
  %v143 = vsel %vm62, %v140, 0.0
  %144 = vadd.xlane.f32.xlu0 %v143
  %v145 = vpop.xlane.xlu0 %144
  %v146 = vsel %vm62, %v142, 0.0
  %147 = vadd.xlane.f32.xlu0 %v146
  %v148 = vpop.xlane.xlu0 %147
  %v149 = vadd.f32 %v125, %v145
  %v150 = vadd.f32 %v126, %v148
  %vm151 = vcmask 7168
  %152 = vst.msk [vmem:[#allocation3] sm:$0xff] %vm151, %v149
  %153 = vst.msk [vmem:[#allocation3 + $0x8] sm:$0xff] %vm151, %v150
  %154 = vst.msk [vmem:[#allocation2] sm:$0xff] %vm151, %v115
  %155 = vst.msk [vmem:[#allocation2 + $0x8] sm:$0xff] %vm151, %v116
  %v156 = vlaneseq
  %v157 = vand.u32 %v156, 127
  %s158 = smul.u32 0, 32
  %v159 = vstv %s158
  %v160 = vadd.s32 %v157, %v159
  %v161 = vld [vmem:[#allocation4] sm:$0xff]
  %v162 = vld [vmem:[#allocation4 + $0x8] sm:$0xff]
  %v163 = vld [vmem:[%s3] sm:$0xff]
  %v164 = vld [vmem:[%s3 + $0x8] sm:$0xff]
  %165 = vset.pattern.permute.xlu0 0
  %166 = vperm.xlu0 %165, %v163
  %v167 = vpop.permute.xlu0 %166
  %168 = vset.pattern.permute.xlu0 0
  %169 = vperm.xlu0 %168, %v164
  %v170 = vpop.permute.xlu0 %169
  %vm171 = vcmp.eq.s32.totalorder %v160, %v167
  %vm172 = vcmp.eq.s32.totalorder %v160, %v170
  %v173 = vsel %vm171, %v101, 0.0
  %v174 = vsel %vm172, %v104, 0.0
  %v175 = vsel %vm62, %v173, 0.0
  %176 = vadd.xlane.f32.xlu0 %v175
  %v177 = vpop.xlane.xlu0 %176
  %v178 = vsel %vm62, %v174, 0.0
  %179 = vadd.xlane.f32.xlu0 %v178
  %v180 = vpop.xlane.xlu0 %179
  %v181 = vadd.f32 %v161, %v177
  %v182 = vadd.f32 %v162, %v180
  %183 = vst.msk [vmem:[#allocation4] sm:$0xff] %vm151, %v181
  %184 = vst.msk [vmem:[#allocation4 + $0x8] sm:$0xff] %vm151, %v182
  // Predicated region
  $region26: #{gmvsae_forward.12} parent=0 // pred_check
    %p185 = pneg %p21
  $region27: #{gmvsae_forward.12} parent=0 // pred_check_branch
    %187 = sbr.rel (%p185) target = $region29
  $region28: #{gmvsae_forward.12} parent=0 // pred_region
    %v188 = vld [vmem:[#allocation2] sm:$0xff]
    %v189 = vld [vmem:[#allocation2 + $0x8] sm:$0xff]
    %v190 = vld [vmem:[#allocation3] sm:$0xff]
    %v191 = vld [vmem:[#allocation3 + $0x8] sm:$0xff]
    %v192 = vlog2.pop %v190
    %v193 = vmul.f32 %v192, 0.6931472
    %v194 = vlog2.pop %v191
    %v195 = vmul.f32 %v194, 0.6931472
    %v196 = vadd.f32 %v188, %v193
    %v197 = vadd.f32 %v189, %v195
    %v198 = vld [vmem:[#allocation4] sm:$0xff]
    %v199 = vld [vmem:[#allocation4 + $0x8] sm:$0xff]
    %v200 = vsub.f32 %v196, %v198
    %v201 = vsub.f32 %v197, %v199
    %v202 = vld [vmem:[%s4] sm:$0xff]
    %v203 = vld [vmem:[%s4 + $0x8] sm:$0xff]
    %v204 = vmul.f32 %v200, %v202
    %v205 = vmul.f32 %v201, %v203
    %206 = vst.msk [vmem:[%s5] sm:$0xff] %vm151, %v204
    %207 = vst.msk [vmem:[%s5 + $0x8] sm:$0xff] %vm151, %v205
  $region29: #{gmvsae_forward.12} parent=0 // pred_fallthru
    _
  // Predicated region
  $region30: #{gmvsae_forward.12} parent=0 // pred_check
    _
  $region31: #{gmvsae_forward.12} parent=0 // pred_check_branch
    %209 = sbr.rel (0) target = $region33
  $region32: #{gmvsae_forward.12} parent=0 // pred_region
    _
  $region33: #{gmvsae_forward.12} parent=0 // pred_fallthru
    _
  // Predicated region
  $region34: #{gmvsae_forward.12} parent=0 // pred_check
    _
  $region35: #{gmvsae_forward.12} parent=0 // pred_check_branch
    %211 = sbr.rel (0) target = $region37
  $region36: #{gmvsae_forward.12} parent=0 // pred_region
    _
  $region37: #{gmvsae_forward.12} parent=0 // pred_fallthru
    _

// kernel: gmvsae_forward.7
$region0: #{gmvsae_forward.7}
  #allocation0 [shape = 'u32[]', space=smem, size = 0x4, offset = 0x4, fixed_abs, tag = 'smem constant byte address 0x4 - core index']
  #allocation1 [shape = 'u32[144,128]{1,0:T(1,128)}', space=vmem, size = 0x12000, scoped, tag = 'internal scratch']
  %s0 = inlined_call_operand.vmem [shape: f32[2,8,32], index: 0, kind: input, shape index: {}]
  %s1 = inlined_call_operand.vmem [shape: f32[2,32], index: 1, kind: input, shape index: {}]
  %s2 = inlined_call_operand.vmem [shape: f32[32,96], index: 2, kind: input, shape index: {}]
  %s3 = inlined_call_operand.vmem [shape: f32[32,96], index: 3, kind: input, shape index: {}]
  %s4 = inlined_call_operand.vmem [shape: f32[1,96], index: 4, kind: input, shape index: {}]
  %s5 = inlined_call_operand.vmem [shape: f32[1,96], index: 5, kind: input, shape index: {}]
  %s6 = inlined_call_operand.vmem [shape: f32[2,8,32], index: 6, kind: output, shape index: {}]
  %s7 = sld [smem:[#allocation0]]
  $region34: #{gmvsae_forward.7} parent=0
    _
  %s9 = ssub.s32 1, %s7
  %s10 = scalar_select 0, %s9, %s7
  // Predicated region
  $region2: #{gmvsae_forward.7} parent=0 // pred_check
    _
  $region3: #{gmvsae_forward.7} parent=0 // pred_check_branch
    %12 = sbr.rel (0) target = $region5
  $region4: #{gmvsae_forward.7} parent=0 // pred_region
    _
  $region5: #{gmvsae_forward.7} parent=0 // pred_fallthru
    _
  // Predicated region
  $region6: #{gmvsae_forward.7} parent=0 // pred_check
    _
  $region7: #{gmvsae_forward.7} parent=0 // pred_check_branch
    %14 = sbr.rel (0) target = $region9
  $region8: #{gmvsae_forward.7} parent=0 // pred_region
    _
  $region9: #{gmvsae_forward.7} parent=0 // pred_fallthru
    _
  // Predicated region
  $region10: #{gmvsae_forward.7} parent=0 // pred_check
    _
  $region11: #{gmvsae_forward.7} parent=0 // pred_check_branch
    %16 = sbr.rel (0) target = $region13
  $region12: #{gmvsae_forward.7} parent=0 // pred_region
    _
  $region13: #{gmvsae_forward.7} parent=0 // pred_fallthru
    _
  // Predicated region
  $region14: #{gmvsae_forward.7} parent=0 // pred_check
    _
  $region15: #{gmvsae_forward.7} parent=0 // pred_check_branch
    %18 = sbr.rel (0) target = $region17
  $region16: #{gmvsae_forward.7} parent=0 // pred_region
    _
  $region17: #{gmvsae_forward.7} parent=0 // pred_fallthru
    _
  // Predicated region
  $region18: #{gmvsae_forward.7} parent=0 // pred_check
    _
  $region19: #{gmvsae_forward.7} parent=0 // pred_check_branch
    %20 = sbr.rel (0) target = $region21
  $region20: #{gmvsae_forward.7} parent=0 // pred_region
    _
  $region21: #{gmvsae_forward.7} parent=0 // pred_fallthru
    _
  // Predicated region
  $region22: #{gmvsae_forward.7} parent=0 // pred_check
    _
  $region23: #{gmvsae_forward.7} parent=0 // pred_check_branch
    %22 = sbr.rel (0) target = $region25
  $region24: #{gmvsae_forward.7} parent=0 // pred_region
    _
  $region25: #{gmvsae_forward.7} parent=0 // pred_fallthru
    _
  %v24 = vld [vmem:[%s0] sm:$0xff]
  %v25 = vld [vmem:[%s0 + $0x8] sm:$0xff]
  %v26 = vpack.c.bf16 %v25, %v24
  %v27 = vld [vmem:[%s2] sm:$0xff]
  %v28 = vld [vmem:[%s2 + $0x8] sm:$0xff]
  %v29 = vld [vmem:[%s2 + $0x10] sm:$0xff]
  %v30 = vld [vmem:[%s2 + $0x18] sm:$0xff]
  %v31 = vpack.c.bf16 %v28, %v27
  %v32 = vpack.c.bf16 %v30, %v29
  %v33 = vld [vmem:[%s4] sm:$0x1]
  %v35 = vlaneseq
  %v36 = vshrl.u32 %v35, 7
  %v37 = vsub.s32 0, %v36
  %v38 = vrot.slane %v33, %v37
  %vm40 = vcmask 261120
  %v42 = vsel %vm40, %v26, 0
  %44 = vmatprep.subr.bf16.mxu0 0
  %45 = vmatpush1.bf16.msra.mxu0 %v31
  %46 = vmatprep.subr.bf16.mxu0 0
  %47 = vmatpush1.bf16.msra.mxu0 %v32
  %48 = vmatprep.subr.bf16.mxu0 0
  %49 = vmatpush1.bf16.msra.mxu0 0
  %50 = vmatprep.subr.bf16.mxu0 0
  %51 = vmatpush1.bf16.msra.mxu0 0
  %52 = vmatprep.subr.bf16.mxu0 0
  %53 = vmatpush1.bf16.msra.mxu0 0
  %54 = vmatprep.subr.bf16.mxu0 0
  %55 = vmatpush1.bf16.msra.mxu0 0
  %56 = vmatprep.subr.bf16.mxu0 0
  %57 = vmatpush1.bf16.msra.mxu0 0
  %58 = vmatprep.subr.bf16.mxu0 0
  %59 = vmatpush1.bf16.msra.mxu0 0
  %60 = vmatprep.subr.bf16.mxu0 0
  %61 = vmatpush1.bf16.msra.mxu0 0
  %62 = vmatprep.subr.bf16.mxu0 0
  %63 = vmatpush1.bf16.msra.mxu0 0
  %64 = vmatprep.subr.bf16.mxu0 0
  %65 = vmatpush1.bf16.msra.mxu0 0
  %66 = vmatprep.subr.bf16.mxu0 0
  %67 = vmatpush1.bf16.msra.mxu0 0
  %68 = vmatprep.subr.bf16.mxu0 0
  %69 = vmatpush1.bf16.msra.mxu0 0
  %70 = vmatprep.subr.bf16.mxu0 0
  %71 = vmatpush1.bf16.msra.mxu0 0
  %72 = vmatprep.subr.bf16.mxu0 0
  %73 = vmatpush1.bf16.msra.mxu0 0
  %74 = vmatprep.subr.bf16.mxu0 0
  %75 = vmatpush1.bf16.msra.mxu0 0
  %76 = vmatprep.mubr.bf16.mxu0 0
  %77 = vmatmul.mubr.bf16.gmra.mrb[0].mxu0 %v42
  %v78 = vpop.f32.mrb[0].mxu0
  %v79 = vadd.f32 %v38, %v78
  %v80 = vpop.f32.mrb[0].mxu0
  %v81 = vpop.f32.mrb[0].mxu0
  %v82 = vadd.f32 %v38, %v81
  %v83 = vpop.f32.mrb[0].mxu0
  %84 = vdwg.mxu0
  %v85 = vld [vmem:[%s3] sm:$0xff]
  %v86 = vld [vmem:[%s3 + $0x8] sm:$0xff]
  %v87 = vld [vmem:[%s3 + $0x10] sm:$0xff]
  %v88 = vld [vmem:[%s3 + $0x18] sm:$0xff]
  %v89 = vpack.c.bf16 %v86, %v85
  %v90 = vpack.c.bf16 %v88, %v87
  %v91 = vld [vmem:[%s5] sm:$0x1]
  %v92 = vld [vmem:[%s1] sm:$0x3]
  %v93 = vpack.c.bf16 %v92, %v92
  %v95 = vlaneseq
  %v96 = vshrl.u32 %v95, 7
  %v97 = vsub.s32 0, %v96
  %v98 = vrot.slane %v91, %v97
  %v101 = vsel %vm40, %v93, 0
  %103 = vmatprep.subr.bf16.mxu0 0
  %104 = vmatpush1.bf16.msra.mxu0 %v89
  %105 = vmatprep.subr.bf16.mxu0 0
  %106 = vmatpush1.bf16.msra.mxu0 %v90
  %107 = vmatprep.subr.bf16.mxu0 0
  %108 = vmatpush1.bf16.msra.mxu0 0
  %109 = vmatprep.subr.bf16.mxu0 0
  %110 = vmatpush1.bf16.msra.mxu0 0
  %111 = vmatprep.subr.bf16.mxu0 0
  %112 = vmatpush1.bf16.msra.mxu0 0
  %113 = vmatprep.subr.bf16.mxu0 0
  %114 = vmatpush1.bf16.msra.mxu0 0
  %115 = vmatprep.subr.bf16.mxu0 0
  %116 = vmatpush1.bf16.msra.mxu0 0
  %117 = vmatprep.subr.bf16.mxu0 0
  %118 = vmatpush1.bf16.msra.mxu0 0
  %119 = vmatprep.subr.bf16.mxu0 0
  %120 = vmatpush1.bf16.msra.mxu0 0
  %121 = vmatprep.subr.bf16.mxu0 0
  %122 = vmatpush1.bf16.msra.mxu0 0
  %123 = vmatprep.subr.bf16.mxu0 0
  %124 = vmatpush1.bf16.msra.mxu0 0
  %125 = vmatprep.subr.bf16.mxu0 0
  %126 = vmatpush1.bf16.msra.mxu0 0
  %127 = vmatprep.subr.bf16.mxu0 0
  %128 = vmatpush1.bf16.msra.mxu0 0
  %129 = vmatprep.subr.bf16.mxu0 0
  %130 = vmatpush1.bf16.msra.mxu0 0
  %131 = vmatprep.subr.bf16.mxu0 0
  %132 = vmatpush1.bf16.msra.mxu0 0
  %133 = vmatprep.subr.bf16.mxu0 0
  %134 = vmatpush1.bf16.msra.mxu0 0
  %135 = vmatprep.mubr.bf16.mxu0 0
  %136 = vmatmul.mubr.bf16.gmra.mrb[0].mxu0 %v101
  %v137 = vpop.f32.mrb[0].mxu0
  %v138 = vadd.f32 %v98, %v137
  %v139 = vpop.f32.mrb[0].mxu0
  %v140 = vpop.f32.mrb[0].mxu0
  %v141 = vpop.f32.mrb[0].mxu0
  %142 = vdwg.mxu0
  %v144 = vrot.slane %v138, 1
  %v147 = vadd.f32 %v79, %v138
  %v148 = vadd.f32 %v82, %v144
  %v149 = vxor.u32 %v147, 2147483648
  %v150 = vxor.u32 %v148, 2147483648
  %v151 = vmul.f32 %v149, 1.442695
  %v152 = vpow.pop %v151
  %v153 = vmul.f32 %v150, 1.442695
  %v154 = vpow.pop %v153
  %v155 = vadd.f32 %v152, 1.0
  %v156 = vadd.f32 %v154, 1.0
  %v157 = vrcp.pop %v155
  %v158 = vmul.f32 1.0, %v157
  %v159 = vrcp.pop %v156
  %v160 = vmul.f32 1.0, %v159
  %161 = vrot.lane.b32.xlu0 %v138, 64
  %v162 = vpop.permute.xlu0 %161
  %163 = vrot.lane.b32.xlu0 %v144, 64
  %v164 = vpop.permute.xlu0 %163
  %v167 = vmul.f32 %v158, %v162
  %v168 = vmul.f32 %v160, %v164
  %171 = vrot.lane.b32.xlu0 %v167, 64
  %v172 = vpop.permute.xlu0 %171
  %173 = vrot.lane.b32.xlu0 %v168, 64
  %v174 = vpop.permute.xlu0 %173
  %v177 = vadd.f32 %v79, %v172
  %v178 = vadd.f32 %v82, %v174
  %v179 = vtanh.pop %v177
  %v180 = vtanh.pop %v178
  %v181 = vsub.f32 1.0, %v158
  %v182 = vsub.f32 1.0, %v160
  %185 = vrot.lane.b32.xlu0 %v179, 96
  %v186 = vpop.permute.xlu0 %185
  %187 = vrot.lane.b32.xlu0 %v180, 96
  %v188 = vpop.permute.xlu0 %187
  %v191 = vmul.f32 %v181, %v186
  %v192 = vmul.f32 %v182, %v188
  %v194 = vrot.slane %v92, 1
  %195 = vrot.lane.b32.xlu0 %v92, 32
  %v196 = vpop.permute.xlu0 %195
  %197 = vrot.lane.b32.xlu0 %v194, 32
  %v198 = vpop.permute.xlu0 %197
  %v201 = vmul.f32 %v158, %v196
  %v202 = vmul.f32 %v160, %v198
  %v203 = vadd.f32 %v191, %v201
  %v204 = vadd.f32 %v192, %v202
  %207 = vrot.lane.b32.xlu0 %v203, 96
  %v208 = vpop.permute.xlu0 %207
  %209 = vrot.lane.b32.xlu0 %v204, 96
  %v210 = vpop.permute.xlu0 %209
  %vm213 = vcmask 253952
  %214 = vst.msk [vmem:[%s6] sm:$0x1] %vm213, %v208
  %215 = vst.msk [vmem:[%s6 + $0x8] sm:$0x1] %vm213, %v210
  %v216 = vpack.c.bf16 %v203, %v203
  %v217 = vpack.c.bf16 %v204, %v204
  %v220 = vunpack.c.l.b16 %v216
  %v221 = vunpack.c.l.b16 %v217
  %v222 = vrot.slane %v221, 7
  %vm223 = vcmask 1041409
  %v224 = vsel %vm223, %v222, %v220
  %v225 = vpack.c.b16 %v224, %v224
  %226 = vrot.lane.b32.xlu0 %v225, 96
  %v227 = vpop.permute.xlu0 %226
  %v229 = vsel %vm40, %v227, 0
  %231 = vmatprep.subr.bf16.mxu0 0
  %232 = vmatpush1.bf16.msra.mxu0 %v89
  %233 = vmatprep.subr.bf16.mxu0 0
  %234 = vmatpush1.bf16.msra.mxu0 %v90
  %235 = vmatprep.subr.bf16.mxu0 0
  %236 = vmatpush1.bf16.msra.mxu0 0
  %237 = vmatprep.subr.bf16.mxu0 0
  %238 = vmatpush1.bf16.msra.mxu0 0
  %239 = vmatprep.subr.bf16.mxu0 0
  %240 = vmatpush1.bf16.msra.mxu0 0
  %241 = vmatprep.subr.bf16.mxu0 0
  %242 = vmatpush1.bf16.msra.mxu0 0
  %243 = vmatprep.subr.bf16.mxu0 0
  %244 = vmatpush1.bf16.msra.mxu0 0
  %245 = vmatprep.subr.bf16.mxu0 0
  %246 = vmatpush1.bf16.msra.mxu0 0
  %247 = vmatprep.subr.bf16.mxu0 0
  %248 = vmatpush1.bf16.msra.mxu0 0
  %249 = vmatprep.subr.bf16.mxu0 0
  %250 = vmatpush1.bf16.msra.mxu0 0
  %251 = vmatprep.subr.bf16.mxu0 0
  %252 = vmatpush1.bf16.msra.mxu0 0
  %253 = vmatprep.subr.bf16.mxu0 0
  %254 = vmatpush1.bf16.msra.mxu0 0
  %255 = vmatprep.subr.bf16.mxu0 0
  %256 = vmatpush1.bf16.msra.mxu0 0
  %257 = vmatprep.subr.bf16.mxu0 0
  %258 = vmatpush1.bf16.msra.mxu0 0
  %259 = vmatprep.subr.bf16.mxu0 0
  %260 = vmatpush1.bf16.msra.mxu0 0
  %261 = vmatprep.subr.bf16.mxu0 0
  %262 = vmatpush1.bf16.msra.mxu0 0
  %263 = vmatprep.mubr.bf16.mxu0 0
  %264 = vmatmul.mubr.bf16.gmra.mrb[0].mxu0 %v229
  %v265 = vpop.f32.mrb[0].mxu0
  %v266 = vadd.f32 %v98, %v265
  %v267 = vpop.f32.mrb[0].mxu0
  %v268 = vpop.f32.mrb[0].mxu0
  %v269 = vpop.f32.mrb[0].mxu0
  %270 = vdwg.mxu0
  %v272 = vrot.slane %v266, 7
  %v275 = vadd.f32 %v79, %v272
  %v276 = vadd.f32 %v82, %v266
  %v277 = vxor.u32 %v275, 2147483648
  %v278 = vxor.u32 %v276, 2147483648
  %v279 = vmul.f32 %v277, 1.442695
  %v280 = vpow.pop %v279
  %v281 = vmul.f32 %v278, 1.442695
  %v282 = vpow.pop %v281
  %v283 = vadd.f32 %v280, 1.0
  %v284 = vadd.f32 %v282, 1.0
  %v285 = vrcp.pop %v283
  %v286 = vmul.f32 1.0, %v285
  %v287 = vrcp.pop %v284
  %v288 = vmul.f32 1.0, %v287
  %289 = vrot.lane.b32.xlu0 %v272, 64
  %v290 = vpop.permute.xlu0 %289
  %291 = vrot.lane.b32.xlu0 %v266, 64
  %v292 = vpop.permute.xlu0 %291
  %v295 = vmul.f32 %v286, %v290
  %v296 = vmul.f32 %v288, %v292
  %299 = vrot.lane.b32.xlu0 %v295, 64
  %v300 = vpop.permute.xlu0 %299
  %301 = vrot.lane.b32.xlu0 %v296, 64
  %v302 = vpop.permute.xlu0 %301
  %v305 = vadd.f32 %v79, %v300
  %v306 = vadd.f32 %v82, %v302
  %v307 = vtanh.pop %v305
  %v308 = vtanh.pop %v306
  %v309 = vsub.f32 1.0, %v286
  %v310 = vsub.f32 1.0, %v288
  %313 = vrot.lane.b32.xlu0 %v307, 96
  %v314 = vpop.permute.xlu0 %313
  %315 = vrot.lane.b32.xlu0 %v308, 96
  %v316 = vpop.permute.xlu0 %315
  %v319 = vmul.f32 %v309, %v314
  %v320 = vmul.f32 %v310, %v316
  %v321 = vrot.slane %v203, 7
  %v322 = vrot.slane %v204, 7
  %v325 = vmul.f32 %v286, %v321
  %v326 = vmul.f32 %v288, %v322
  %v327 = vadd.f32 %v319, %v325
  %v328 = vadd.f32 %v320, %v326
  %331 = vrot.lane.b32.xlu0 %v327, 96
  %v332 = vpop.permute.xlu0 %331
  %333 = vrot.lane.b32.xlu0 %v328, 96
  %v334 = vpop.permute.xlu0 %333
  %vm337 = vcmask 254977
  %338 = vst.msk [vmem:[%s6] sm:$0x2] %vm337, %v332
  %339 = vst.msk [vmem:[%s6 + $0x8] sm:$0x2] %vm337, %v334
  %v340 = vpack.c.bf16 %v327, %v327
  %v341 = vpack.c.bf16 %v328, %v328
  %v344 = vunpack.c.l.b16 %v340
  %v345 = vunpack.c.l.b16 %v341
  %v346 = vrot.slane %v344, 1
  %v347 = vsel %vm223, %v345, %v346
  %v348 = vpack.c.b16 %v347, %v347
  %349 = vrot.lane.b32.xlu0 %v348, 96
  %v350 = vpop.permute.xlu0 %349
  %v352 = vsel %vm40, %v350, 0
  %354 = vmatprep.subr.bf16.mxu0 0
  %355 = vmatpush1.bf16.msra.mxu0 %v89
  %356 = vmatprep.subr.bf16.mxu0 0
  %357 = vmatpush1.bf16.msra.mxu0 %v90
  %358 = vmatprep.subr.bf16.mxu0 0
  %359 = vmatpush1.bf16.msra.mxu0 0
  %360 = vmatprep.subr.bf16.mxu0 0
  %361 = vmatpush1.bf16.msra.mxu0 0
  %362 = vmatprep.subr.bf16.mxu0 0
  %363 = vmatpush1.bf16.msra.mxu0 0
  %364 = vmatprep.subr.bf16.mxu0 0
  %365 = vmatpush1.bf16.msra.mxu0 0
  %366 = vmatprep.subr.bf16.mxu0 0
  %367 = vmatpush1.bf16.msra.mxu0 0
  %368 = vmatprep.subr.bf16.mxu0 0
  %369 = vmatpush1.bf16.msra.mxu0 0
  %370 = vmatprep.subr.bf16.mxu0 0
  %371 = vmatpush1.bf16.msra.mxu0 0
  %372 = vmatprep.subr.bf16.mxu0 0
  %373 = vmatpush1.bf16.msra.mxu0 0
  %374 = vmatprep.subr.bf16.mxu0 0
  %375 = vmatpush1.bf16.msra.mxu0 0
  %376 = vmatprep.subr.bf16.mxu0 0
  %377 = vmatpush1.bf16.msra.mxu0 0
  %378 = vmatprep.subr.bf16.mxu0 0
  %379 = vmatpush1.bf16.msra.mxu0 0
  %380 = vmatprep.subr.bf16.mxu0 0
  %381 = vmatpush1.bf16.msra.mxu0 0
  %382 = vmatprep.subr.bf16.mxu0 0
  %383 = vmatpush1.bf16.msra.mxu0 0
  %384 = vmatprep.subr.bf16.mxu0 0
  %385 = vmatpush1.bf16.msra.mxu0 0
  %386 = vmatprep.mubr.bf16.mxu0 0
  %387 = vmatmul.mubr.bf16.gmra.mrb[0].mxu0 %v352
  %v388 = vpop.f32.mrb[0].mxu0
  %v389 = vadd.f32 %v98, %v388
  %v390 = vpop.f32.mrb[0].mxu0
  %v391 = vpop.f32.mrb[0].mxu0
  %v392 = vpop.f32.mrb[0].mxu0
  %393 = vdwg.mxu0
  %v395 = vrot.slane %v389, 6
  %v396 = vrot.slane %v389, 7
  %v399 = vadd.f32 %v79, %v395
  %v400 = vadd.f32 %v82, %v396
  %v401 = vxor.u32 %v399, 2147483648
  %v402 = vxor.u32 %v400, 2147483648
  %v403 = vmul.f32 %v401, 1.442695
  %v404 = vpow.pop %v403
  %v405 = vmul.f32 %v402, 1.442695
  %v406 = vpow.pop %v405
  %v407 = vadd.f32 %v404, 1.0
  %v408 = vadd.f32 %v406, 1.0
  %v409 = vrcp.pop %v407
  %v410 = vmul.f32 1.0, %v409
  %v411 = vrcp.pop %v408
  %v412 = vmul.f32 1.0, %v411
  %413 = vrot.lane.b32.xlu0 %v395, 64
  %v414 = vpop.permute.xlu0 %413
  %415 = vrot.lane.b32.xlu0 %v396, 64
  %v416 = vpop.permute.xlu0 %415
  %v419 = vmul.f32 %v410, %v414
  %v420 = vmul.f32 %v412, %v416
  %423 = vrot.lane.b32.xlu0 %v419, 64
  %v424 = vpop.permute.xlu0 %423
  %425 = vrot.lane.b32.xlu0 %v420, 64
  %v426 = vpop.permute.xlu0 %425
  %v429 = vadd.f32 %v79, %v424
  %v430 = vadd.f32 %v82, %v426
  %v431 = vtanh.pop %v429
  %v432 = vtanh.pop %v430
  %v433 = vsub.f32 1.0, %v410
  %v434 = vsub.f32 1.0, %v412
  %437 = vrot.lane.b32.xlu0 %v431, 96
  %v438 = vpop.permute.xlu0 %437
  %439 = vrot.lane.b32.xlu0 %v432, 96
  %v440 = vpop.permute.xlu0 %439
  %v443 = vmul.f32 %v433, %v438
  %v444 = vmul.f32 %v434, %v440
  %v445 = vrot.slane %v327, 7
  %v446 = vrot.slane %v328, 7
  %v449 = vmul.f32 %v410, %v445
  %v450 = vmul.f32 %v412, %v446
  %v451 = vadd.f32 %v443, %v449
  %v452 = vadd.f32 %v444, %v450
  %455 = vrot.lane.b32.xlu0 %v451, 96
  %v456 = vpop.permute.xlu0 %455
  %457 = vrot.lane.b32.xlu0 %v452, 96
  %v458 = vpop.permute.xlu0 %457
  %vm461 = vcmask 256002
  %462 = vst.msk [vmem:[%s6] sm:$0x4] %vm461, %v456
  %463 = vst.msk [vmem:[%s6 + $0x8] sm:$0x4] %vm461, %v458
  %v464 = vpack.c.bf16 %v451, %v451
  %v465 = vpack.c.bf16 %v452, %v452
  %v468 = vunpack.c.l.b16 %v464
  %v469 = vunpack.c.l.b16 %v465
  %v470 = vrot.slane %v468, 2
  %v471 = vrot.slane %v469, 1
  %v472 = vsel %vm223, %v471, %v470
  %v473 = vpack.c.b16 %v472, %v472
  %474 = vrot.lane.b32.xlu0 %v473, 96
  %v475 = vpop.permute.xlu0 %474
  %v477 = vsel %vm40, %v475, 0
  %479 = vmatprep.subr.bf16.mxu0 0
  %480 = vmatpush1.bf16.msra.mxu0 %v89
  %481 = vmatprep.subr.bf16.mxu0 0
  %482 = vmatpush1.bf16.msra.mxu0 %v90
  %483 = vmatprep.subr.bf16.mxu0 0
  %484 = vmatpush1.bf16.msra.mxu0 0
  %485 = vmatprep.subr.bf16.mxu0 0
  %486 = vmatpush1.bf16.msra.mxu0 0
  %487 = vmatprep.subr.bf16.mxu0 0
  %488 = vmatpush1.bf16.msra.mxu0 0
  %489 = vmatprep.subr.bf16.mxu0 0
  %490 = vmatpush1.bf16.msra.mxu0 0
  %491 = vmatprep.subr.bf16.mxu0 0
  %492 = vmatpush1.bf16.msra.mxu0 0
  %493 = vmatprep.subr.bf16.mxu0 0
  %494 = vmatpush1.bf16.msra.mxu0 0
  %495 = vmatprep.subr.bf16.mxu0 0
  %496 = vmatpush1.bf16.msra.mxu0 0
  %497 = vmatprep.subr.bf16.mxu0 0
  %498 = vmatpush1.bf16.msra.mxu0 0
  %499 = vmatprep.subr.bf16.mxu0 0
  %500 = vmatpush1.bf16.msra.mxu0 0
  %501 = vmatprep.subr.bf16.mxu0 0
  %502 = vmatpush1.bf16.msra.mxu0 0
  %503 = vmatprep.subr.bf16.mxu0 0
  %504 = vmatpush1.bf16.msra.mxu0 0
  %505 = vmatprep.subr.bf16.mxu0 0
  %506 = vmatpush1.bf16.msra.mxu0 0
  %507 = vmatprep.subr.bf16.mxu0 0
  %508 = vmatpush1.bf16.msra.mxu0 0
  %509 = vmatprep.subr.bf16.mxu0 0
  %510 = vmatpush1.bf16.msra.mxu0 0
  %511 = vmatprep.mubr.bf16.mxu0 0
  %512 = vmatmul.mubr.bf16.gmra.mrb[0].mxu0 %v477
  %v513 = vpop.f32.mrb[0].mxu0
  %v514 = vadd.f32 %v98, %v513
  %v515 = vpop.f32.mrb[0].mxu0
  %v516 = vpop.f32.mrb[0].mxu0
  %v517 = vpop.f32.mrb[0].mxu0
  %518 = vdwg.mxu0
  %v520 = vrot.slane %v514, 5
  %v521 = vrot.slane %v514, 6
  %v524 = vadd.f32 %v79, %v520
  %v525 = vadd.f32 %v82, %v521
  %v526 = vxor.u32 %v524, 2147483648
  %v527 = vxor.u32 %v525, 2147483648
  %v528 = vmul.f32 %v526, 1.442695
  %v529 = vpow.pop %v528
  %v530 = vmul.f32 %v527, 1.442695
  %v531 = vpow.pop %v530
  %v532 = vadd.f32 %v529, 1.0
  %v533 = vadd.f32 %v531, 1.0
  %v534 = vrcp.pop %v532
  %v535 = vmul.f32 1.0, %v534
  %v536 = vrcp.pop %v533
  %v537 = vmul.f32 1.0, %v536
  %538 = vrot.lane.b32.xlu0 %v520, 64
  %v539 = vpop.permute.xlu0 %538
  %540 = vrot.lane.b32.xlu0 %v521, 64
  %v541 = vpop.permute.xlu0 %540
  %v544 = vmul.f32 %v535, %v539
  %v545 = vmul.f32 %v537, %v541
  %548 = vrot.lane.b32.xlu0 %v544, 64
  %v549 = vpop.permute.xlu0 %548
  %550 = vrot.lane.b32.xlu0 %v545, 64
  %v551 = vpop.permute.xlu0 %550
  %v554 = vadd.f32 %v79, %v549
  %v555 = vadd.f32 %v82, %v551
  %v556 = vtanh.pop %v554
  %v557 = vtanh.pop %v555
  %v558 = vsub.f32 1.0, %v535
  %v559 = vsub.f32 1.0, %v537
  %562 = vrot.lane.b32.xlu0 %v556, 96
  %v563 = vpop.permute.xlu0 %562
  %564 = vrot.lane.b32.xlu0 %v557, 96
  %v565 = vpop.permute.xlu0 %564
  %v568 = vmul.f32 %v558, %v563
  %v569 = vmul.f32 %v559, %v565
  %v570 = vrot.slane %v451, 7
  %v571 = vrot.slane %v452, 7
  %v574 = vmul.f32 %v535, %v570
  %v575 = vmul.f32 %v537, %v571
  %v576 = vadd.f32 %v568, %v574
  %v577 = vadd.f32 %v569, %v575
  %580 = vrot.lane.b32.xlu0 %v576, 96
  %v581 = vpop.permute.xlu0 %580
  %582 = vrot.lane.b32.xlu0 %v577, 96
  %v583 = vpop.permute.xlu0 %582
  %vm586 = vcmask 257027
  %587 = vst.msk [vmem:[%s6] sm:$0x8] %vm586, %v581
  %588 = vst.msk [vmem:[%s6 + $0x8] sm:$0x8] %vm586, %v583
  %v589 = vpack.c.bf16 %v576, %v576
  %v590 = vpack.c.bf16 %v577, %v577
  %v593 = vunpack.c.l.b16 %v589
  %v594 = vunpack.c.l.b16 %v590
  %v595 = vrot.slane %v593, 3
  %v596 = vrot.slane %v594, 2
  %v597 = vsel %vm223, %v596, %v595
  %v598 = vpack.c.b16 %v597, %v597
  %599 = vrot.lane.b32.xlu0 %v598, 96
  %v600 = vpop.permute.xlu0 %599
  %v602 = vsel %vm40, %v600, 0
  %604 = vmatprep.subr.bf16.mxu0 0
  %605 = vmatpush1.bf16.msra.mxu0 %v89
  %606 = vmatprep.subr.bf16.mxu0 0
  %607 = vmatpush1.bf16.msra.mxu0 %v90
  %608 = vmatprep.subr.bf16.mxu0 0
  %609 = vmatpush1.bf16.msra.mxu0 0
  %610 = vmatprep.subr.bf16.mxu0 0
  %611 = vmatpush1.bf16.msra.mxu0 0
  %612 = vmatprep.subr.bf16.mxu0 0
  %613 = vmatpush1.bf16.msra.mxu0 0
  %614 = vmatprep.subr.bf16.mxu0 0
  %615 = vmatpush1.bf16.msra.mxu0 0
  %616 = vmatprep.subr.bf16.mxu0 0
  %617 = vmatpush1.bf16.msra.mxu0 0
  %618 = vmatprep.subr.bf16.mxu0 0
  %619 = vmatpush1.bf16.msra.mxu0 0
  %620 = vmatprep.subr.bf16.mxu0 0
  %621 = vmatpush1.bf16.msra.mxu0 0
  %622 = vmatprep.subr.bf16.mxu0 0
  %623 = vmatpush1.bf16.msra.mxu0 0
  %624 = vmatprep.subr.bf16.mxu0 0
  %625 = vmatpush1.bf16.msra.mxu0 0
  %626 = vmatprep.subr.bf16.mxu0 0
  %627 = vmatpush1.bf16.msra.mxu0 0
  %628 = vmatprep.subr.bf16.mxu0 0
  %629 = vmatpush1.bf16.msra.mxu0 0
  %630 = vmatprep.subr.bf16.mxu0 0
  %631 = vmatpush1.bf16.msra.mxu0 0
  %632 = vmatprep.subr.bf16.mxu0 0
  %633 = vmatpush1.bf16.msra.mxu0 0
  %634 = vmatprep.subr.bf16.mxu0 0
  %635 = vmatpush1.bf16.msra.mxu0 0
  %636 = vmatprep.mubr.bf16.mxu0 0
  %637 = vmatmul.mubr.bf16.gmra.mrb[0].mxu0 %v602
  %v638 = vpop.f32.mrb[0].mxu0
  %v639 = vadd.f32 %v98, %v638
  %v640 = vpop.f32.mrb[0].mxu0
  %v641 = vpop.f32.mrb[0].mxu0
  %v642 = vpop.f32.mrb[0].mxu0
  %643 = vdwg.mxu0
  %v645 = vrot.slane %v639, 4
  %v646 = vrot.slane %v639, 5
  %v649 = vadd.f32 %v79, %v645
  %v650 = vadd.f32 %v82, %v646
  %v651 = vxor.u32 %v649, 2147483648
  %v652 = vxor.u32 %v650, 2147483648
  %v653 = vmul.f32 %v651, 1.442695
  %v654 = vpow.pop %v653
  %v655 = vmul.f32 %v652, 1.442695
  %v656 = vpow.pop %v655
  %v657 = vadd.f32 %v654, 1.0
  %v658 = vadd.f32 %v656, 1.0
  %v659 = vrcp.pop %v657
  %v660 = vmul.f32 1.0, %v659
  %v661 = vrcp.pop %v658
  %v662 = vmul.f32 1.0, %v661
  %663 = vrot.lane.b32.xlu0 %v645, 64
  %v664 = vpop.permute.xlu0 %663
  %665 = vrot.lane.b32.xlu0 %v646, 64
  %v666 = vpop.permute.xlu0 %665
  %v669 = vmul.f32 %v660, %v664
  %v670 = vmul.f32 %v662, %v666
  %673 = vrot.lane.b32.xlu0 %v669, 64
  %v674 = vpop.permute.xlu0 %673
  %675 = vrot.lane.b32.xlu0 %v670, 64
  %v676 = vpop.permute.xlu0 %675
  %v679 = vadd.f32 %v79, %v674
  %v680 = vadd.f32 %v82, %v676
  %v681 = vtanh.pop %v679
  %v682 = vtanh.pop %v680
  %v683 = vsub.f32 1.0, %v660
  %v684 = vsub.f32 1.0, %v662
  %687 = vrot.lane.b32.xlu0 %v681, 96
  %v688 = vpop.permute.xlu0 %687
  %689 = vrot.lane.b32.xlu0 %v682, 96
  %v690 = vpop.permute.xlu0 %689
  %v693 = vmul.f32 %v683, %v688
  %v694 = vmul.f32 %v684, %v690
  %v695 = vrot.slane %v576, 7
  %v696 = vrot.slane %v577, 7
  %v699 = vmul.f32 %v660, %v695
  %v700 = vmul.f32 %v662, %v696
  %v701 = vadd.f32 %v693, %v699
  %v702 = vadd.f32 %v694, %v700
  %705 = vrot.lane.b32.xlu0 %v701, 96
  %v706 = vpop.permute.xlu0 %705
  %707 = vrot.lane.b32.xlu0 %v702, 96
  %v708 = vpop.permute.xlu0 %707
  %vm711 = vcmask 258052
  %712 = vst.msk [vmem:[%s6] sm:$0x10] %vm711, %v706
  %713 = vst.msk [vmem:[%s6 + $0x8] sm:$0x10] %vm711, %v708
  %v714 = vpack.c.bf16 %v701, %v701
  %v715 = vpack.c.bf16 %v702, %v702
  %v718 = vunpack.c.l.b16 %v714
  %v719 = vunpack.c.l.b16 %v715
  %v720 = vrot.slane %v718, 4
  %v721 = vrot.slane %v719, 3
  %v722 = vsel %vm223, %v721, %v720
  %v723 = vpack.c.b16 %v722, %v722
  %724 = vrot.lane.b32.xlu0 %v723, 96
  %v725 = vpop.permute.xlu0 %724
  %v727 = vsel %vm40, %v725, 0
  %729 = vmatprep.subr.bf16.mxu0 0
  %730 = vmatpush1.bf16.msra.mxu0 %v89
  %731 = vmatprep.subr.bf16.mxu0 0
  %732 = vmatpush1.bf16.msra.mxu0 %v90
  %733 = vmatprep.subr.bf16.mxu0 0
  %734 = vmatpush1.bf16.msra.mxu0 0
  %735 = vmatprep.subr.bf16.mxu0 0
  %736 = vmatpush1.bf16.msra.mxu0 0
  %737 = vmatprep.subr.bf16.mxu0 0
  %738 = vmatpush1.bf16.msra.mxu0 0
  %739 = vmatprep.subr.bf16.mxu0 0
  %740 = vmatpush1.bf16.msra.mxu0 0
  %741 = vmatprep.subr.bf16.mxu0 0
  %742 = vmatpush1.bf16.msra.mxu0 0
  %743 = vmatprep.subr.bf16.mxu0 0
  %744 = vmatpush1.bf16.msra.mxu0 0
  %745 = vmatprep.subr.bf16.mxu0 0
  %746 = vmatpush1.bf16.msra.mxu0 0
  %747 = vmatprep.subr.bf16.mxu0 0
  %748 = vmatpush1.bf16.msra.mxu0 0
  %749 = vmatprep.subr.bf16.mxu0 0
  %750 = vmatpush1.bf16.msra.mxu0 0
  %751 = vmatprep.subr.bf16.mxu0 0
  %752 = vmatpush1.bf16.msra.mxu0 0
  %753 = vmatprep.subr.bf16.mxu0 0
  %754 = vmatpush1.bf16.msra.mxu0 0
  %755 = vmatprep.subr.bf16.mxu0 0
  %756 = vmatpush1.bf16.msra.mxu0 0
  %757 = vmatprep.subr.bf16.mxu0 0
  %758 = vmatpush1.bf16.msra.mxu0 0
  %759 = vmatprep.subr.bf16.mxu0 0
  %760 = vmatpush1.bf16.msra.mxu0 0
  %761 = vmatprep.mubr.bf16.mxu0 0
  %762 = vmatmul.mubr.bf16.gmra.mrb[0].mxu0 %v727
  %v763 = vpop.f32.mrb[0].mxu0
  %v764 = vadd.f32 %v98, %v763
  %v765 = vpop.f32.mrb[0].mxu0
  %v766 = vpop.f32.mrb[0].mxu0
  %v767 = vpop.f32.mrb[0].mxu0
  %768 = vdwg.mxu0
  %v770 = vrot.slane %v764, 3
  %v771 = vrot.slane %v764, 4
  %v774 = vadd.f32 %v79, %v770
  %v775 = vadd.f32 %v82, %v771
  %v776 = vxor.u32 %v774, 2147483648
  %v777 = vxor.u32 %v775, 2147483648
  %v778 = vmul.f32 %v776, 1.442695
  %v779 = vpow.pop %v778
  %v780 = vmul.f32 %v777, 1.442695
  %v781 = vpow.pop %v780
  %v782 = vadd.f32 %v779, 1.0
  %v783 = vadd.f32 %v781, 1.0
  %v784 = vrcp.pop %v782
  %v785 = vmul.f32 1.0, %v784
  %v786 = vrcp.pop %v783
  %v787 = vmul.f32 1.0, %v786
  %788 = vrot.lane.b32.xlu0 %v770, 64
  %v789 = vpop.permute.xlu0 %788
  %790 = vrot.lane.b32.xlu0 %v771, 64
  %v791 = vpop.permute.xlu0 %790
  %v794 = vmul.f32 %v785, %v789
  %v795 = vmul.f32 %v787, %v791
  %798 = vrot.lane.b32.xlu0 %v794, 64
  %v799 = vpop.permute.xlu0 %798
  %800 = vrot.lane.b32.xlu0 %v795, 64
  %v801 = vpop.permute.xlu0 %800
  %v804 = vadd.f32 %v79, %v799
  %v805 = vadd.f32 %v82, %v801
  %v806 = vtanh.pop %v804
  %v807 = vtanh.pop %v805
  %v808 = vsub.f32 1.0, %v785
  %v809 = vsub.f32 1.0, %v787
  %812 = vrot.lane.b32.xlu0 %v806, 96
  %v813 = vpop.permute.xlu0 %812
  %814 = vrot.lane.b32.xlu0 %v807, 96
  %v815 = vpop.permute.xlu0 %814
  %v818 = vmul.f32 %v808, %v813
  %v819 = vmul.f32 %v809, %v815
  %v820 = vrot.slane %v701, 7
  %v821 = vrot.slane %v702, 7
  %v824 = vmul.f32 %v785, %v820
  %v825 = vmul.f32 %v787, %v821
  %v826 = vadd.f32 %v818, %v824
  %v827 = vadd.f32 %v819, %v825
  %830 = vrot.lane.b32.xlu0 %v826, 96
  %v831 = vpop.permute.xlu0 %830
  %832 = vrot.lane.b32.xlu0 %v827, 96
  %v833 = vpop.permute.xlu0 %832
  %vm836 = vcmask 259077
  %837 = vst.msk [vmem:[%s6] sm:$0x20] %vm836, %v831
  %838 = vst.msk [vmem:[%s6 + $0x8] sm:$0x20] %vm836, %v833
  %v839 = vpack.c.bf16 %v826, %v826
  %v840 = vpack.c.bf16 %v827, %v827
  %v843 = vunpack.c.l.b16 %v839
  %v844 = vunpack.c.l.b16 %v840
  %v845 = vrot.slane %v843, 5
  %v846 = vrot.slane %v844, 4
  %v847 = vsel %vm223, %v846, %v845
  %v848 = vpack.c.b16 %v847, %v847
  %849 = vrot.lane.b32.xlu0 %v848, 96
  %v850 = vpop.permute.xlu0 %849
  %v852 = vsel %vm40, %v850, 0
  %854 = vmatprep.subr.bf16.mxu0 0
  %855 = vmatpush1.bf16.msra.mxu0 %v89
  %856 = vmatprep.subr.bf16.mxu0 0
  %857 = vmatpush1.bf16.msra.mxu0 %v90
  %858 = vmatprep.subr.bf16.mxu0 0
  %859 = vmatpush1.bf16.msra.mxu0 0
  %860 = vmatprep.subr.bf16.mxu0 0
  %861 = vmatpush1.bf16.msra.mxu0 0
  %862 = vmatprep.subr.bf16.mxu0 0
  %863 = vmatpush1.bf16.msra.mxu0 0
  %864 = vmatprep.subr.bf16.mxu0 0
  %865 = vmatpush1.bf16.msra.mxu0 0
  %866 = vmatprep.subr.bf16.mxu0 0
  %867 = vmatpush1.bf16.msra.mxu0 0
  %868 = vmatprep.subr.bf16.mxu0 0
  %869 = vmatpush1.bf16.msra.mxu0 0
  %870 = vmatprep.subr.bf16.mxu0 0
  %871 = vmatpush1.bf16.msra.mxu0 0
  %872 = vmatprep.subr.bf16.mxu0 0
  %873 = vmatpush1.bf16.msra.mxu0 0
  %874 = vmatprep.subr.bf16.mxu0 0
  %875 = vmatpush1.bf16.msra.mxu0 0
  %876 = vmatprep.subr.bf16.mxu0 0
  %877 = vmatpush1.bf16.msra.mxu0 0
  %878 = vmatprep.subr.bf16.mxu0 0
  %879 = vmatpush1.bf16.msra.mxu0 0
  %880 = vmatprep.subr.bf16.mxu0 0
  %881 = vmatpush1.bf16.msra.mxu0 0
  %882 = vmatprep.subr.bf16.mxu0 0
  %883 = vmatpush1.bf16.msra.mxu0 0
  %884 = vmatprep.subr.bf16.mxu0 0
  %885 = vmatpush1.bf16.msra.mxu0 0
  %886 = vmatprep.mubr.bf16.mxu0 0
  %887 = vmatmul.mubr.bf16.gmra.mrb[0].mxu0 %v852
  %v888 = vpop.f32.mrb[0].mxu0
  %v889 = vadd.f32 %v98, %v888
  %v890 = vpop.f32.mrb[0].mxu0
  %v891 = vpop.f32.mrb[0].mxu0
  %v892 = vpop.f32.mrb[0].mxu0
  %893 = vdwg.mxu0
  %v895 = vrot.slane %v889, 2
  %v896 = vrot.slane %v889, 3
  %v899 = vadd.f32 %v79, %v895
  %v900 = vadd.f32 %v82, %v896
  %v901 = vxor.u32 %v899, 2147483648
  %v902 = vxor.u32 %v900, 2147483648
  %v903 = vmul.f32 %v901, 1.442695
  %v904 = vpow.pop %v903
  %v905 = vmul.f32 %v902, 1.442695
  %v906 = vpow.pop %v905
  %v907 = vadd.f32 %v904, 1.0
  %v908 = vadd.f32 %v906, 1.0
  %v909 = vrcp.pop %v907
  %v910 = vmul.f32 1.0, %v909
  %v911 = vrcp.pop %v908
  %v912 = vmul.f32 1.0, %v911
  %913 = vrot.lane.b32.xlu0 %v895, 64
  %v914 = vpop.permute.xlu0 %913
  %915 = vrot.lane.b32.xlu0 %v896, 64
  %v916 = vpop.permute.xlu0 %915
  %v919 = vmul.f32 %v910, %v914
  %v920 = vmul.f32 %v912, %v916
  %923 = vrot.lane.b32.xlu0 %v919, 64
  %v924 = vpop.permute.xlu0 %923
  %925 = vrot.lane.b32.xlu0 %v920, 64
  %v926 = vpop.permute.xlu0 %925
  %v929 = vadd.f32 %v79, %v924
  %v930 = vadd.f32 %v82, %v926
  %v931 = vtanh.pop %v929
  %v932 = vtanh.pop %v930
  %v933 = vsub.f32 1.0, %v910
  %v934 = vsub.f32 1.0, %v912
  %937 = vrot.lane.b32.xlu0 %v931, 96
  %v938 = vpop.permute.xlu0 %937
  %939 = vrot.lane.b32.xlu0 %v932, 96
  %v940 = vpop.permute.xlu0 %939
  %v943 = vmul.f32 %v933, %v938
  %v944 = vmul.f32 %v934, %v940
  %v945 = vrot.slane %v826, 7
  %v946 = vrot.slane %v827, 7
  %v949 = vmul.f32 %v910, %v945
  %v950 = vmul.f32 %v912, %v946
  %v951 = vadd.f32 %v943, %v949
  %v952 = vadd.f32 %v944, %v950
  %955 = vrot.lane.b32.xlu0 %v951, 96
  %v956 = vpop.permute.xlu0 %955
  %957 = vrot.lane.b32.xlu0 %v952, 96
  %v958 = vpop.permute.xlu0 %957
  %vm961 = vcmask 260102
  %962 = vst.msk [vmem:[%s6] sm:$0x40] %vm961, %v956
  %963 = vst.msk [vmem:[%s6 + $0x8] sm:$0x40] %vm961, %v958
  %v964 = vpack.c.bf16 %v951, %v951
  %v965 = vpack.c.bf16 %v952, %v952
  %v968 = vunpack.c.l.b16 %v964
  %v969 = vunpack.c.l.b16 %v965
  %v970 = vrot.slane %v968, 6
  %v971 = vrot.slane %v969, 5
  %v972 = vsel %vm223, %v971, %v970
  %v973 = vpack.c.b16 %v972, %v972
  %974 = vrot.lane.b32.xlu0 %v973, 96
  %v975 = vpop.permute.xlu0 %974
  %v977 = vsel %vm40, %v975, 0
  %979 = vmatprep.subr.bf16.mxu0 0
  %980 = vmatpush1.bf16.msra.mxu0 %v89
  %981 = vmatprep.subr.bf16.mxu0 0
  %982 = vmatpush1.bf16.msra.mxu0 %v90
  %983 = vmatprep.subr.bf16.mxu0 0
  %984 = vmatpush1.bf16.msra.mxu0 0
  %985 = vmatprep.subr.bf16.mxu0 0
  %986 = vmatpush1.bf16.msra.mxu0 0
  %987 = vmatprep.subr.bf16.mxu0 0
  %988 = vmatpush1.bf16.msra.mxu0 0
  %989 = vmatprep.subr.bf16.mxu0 0
  %990 = vmatpush1.bf16.msra.mxu0 0
  %991 = vmatprep.subr.bf16.mxu0 0
  %992 = vmatpush1.bf16.msra.mxu0 0
  %993 = vmatprep.subr.bf16.mxu0 0
  %994 = vmatpush1.bf16.msra.mxu0 0
  %995 = vmatprep.subr.bf16.mxu0 0
  %996 = vmatpush1.bf16.msra.mxu0 0
  %997 = vmatprep.subr.bf16.mxu0 0
  %998 = vmatpush1.bf16.msra.mxu0 0
  %999 = vmatprep.subr.bf16.mxu0 0
  %1000 = vmatpush1.bf16.msra.mxu0 0
  %1001 = vmatprep.subr.bf16.mxu0 0
  %1002 = vmatpush1.bf16.msra.mxu0 0
  %1003 = vmatprep.subr.bf16.mxu0 0
  %1004 = vmatpush1.bf16.msra.mxu0 0
  %1005 = vmatprep.subr.bf16.mxu0 0
  %1006 = vmatpush1.bf16.msra.mxu0 0
  %1007 = vmatprep.subr.bf16.mxu0 0
  %1008 = vmatpush1.bf16.msra.mxu0 0
  %1009 = vmatprep.subr.bf16.mxu0 0
  %1010 = vmatpush1.bf16.msra.mxu0 0
  %1011 = vmatprep.mubr.bf16.mxu0 0
  %1012 = vmatmul.mubr.bf16.gmra.mrb[0].mxu0 %v977
  %v1013 = vpop.f32.mrb[0].mxu0
  %v1014 = vadd.f32 %v98, %v1013
  %v1015 = vpop.f32.mrb[0].mxu0
  %v1016 = vpop.f32.mrb[0].mxu0
  %v1017 = vpop.f32.mrb[0].mxu0
  %1018 = vdwg.mxu0
  %v1020 = vrot.slane %v1014, 1
  %v1021 = vrot.slane %v1014, 2
  %v1024 = vadd.f32 %v79, %v1020
  %v1025 = vadd.f32 %v82, %v1021
  %v1026 = vxor.u32 %v1024, 2147483648
  %v1027 = vxor.u32 %v1025, 2147483648
  %v1028 = vmul.f32 %v1026, 1.442695
  %v1029 = vpow.pop %v1028
  %v1030 = vmul.f32 %v1027, 1.442695
  %v1031 = vpow.pop %v1030
  %v1032 = vadd.f32 %v1029, 1.0
  %v1033 = vadd.f32 %v1031, 1.0
  %v1034 = vrcp.pop %v1032
  %v1035 = vmul.f32 1.0, %v1034
  %v1036 = vrcp.pop %v1033
  %v1037 = vmul.f32 1.0, %v1036
  %1038 = vrot.lane.b32.xlu0 %v1020, 64
  %v1039 = vpop.permute.xlu0 %1038
  %1040 = vrot.lane.b32.xlu0 %v1021, 64
  %v1041 = vpop.permute.xlu0 %1040
  %v1044 = vmul.f32 %v1035, %v1039
  %v1045 = vmul.f32 %v1037, %v1041
  %1048 = vrot.lane.b32.xlu0 %v1044, 64
  %v1049 = vpop.permute.xlu0 %1048
  %1050 = vrot.lane.b32.xlu0 %v1045, 64
  %v1051 = vpop.permute.xlu0 %1050
  %v1054 = vadd.f32 %v79, %v1049
  %v1055 = vadd.f32 %v82, %v1051
  %v1056 = vtanh.pop %v1054
  %v1057 = vtanh.pop %v1055
  %v1058 = vsub.f32 1.0, %v1035
  %v1059 = vsub.f32 1.0, %v1037
  %1062 = vrot.lane.b32.xlu0 %v1056, 96
  %v1063 = vpop.permute.xlu0 %1062
  %1064 = vrot.lane.b32.xlu0 %v1057, 96
  %v1065 = vpop.permute.xlu0 %1064
  %v1068 = vmul.f32 %v1058, %v1063
  %v1069 = vmul.f32 %v1059, %v1065
  %v1070 = vrot.slane %v951, 7
  %v1071 = vrot.slane %v952, 7
  %v1074 = vmul.f32 %v1035, %v1070
  %v1075 = vmul.f32 %v1037, %v1071
  %v1076 = vadd.f32 %v1068, %v1074
  %v1077 = vadd.f32 %v1069, %v1075
  %1080 = vrot.lane.b32.xlu0 %v1076, 96
  %v1081 = vpop.permute.xlu0 %1080
  %1082 = vrot.lane.b32.xlu0 %v1077, 96
  %v1083 = vpop.permute.xlu0 %1082
  %vm1086 = vcmask 261127
  %1087 = vst.msk [vmem:[%s6] sm:$0x80] %vm1086, %v1081
  %1088 = vst.msk [vmem:[%s6 + $0x8] sm:$0x80] %vm1086, %v1083
  // Predicated region
  $region26: #{gmvsae_forward.7} parent=0 // pred_check
    _
  $region27: #{gmvsae_forward.7} parent=0 // pred_check_branch
    %1090 = sbr.rel (0) target = $region29
  $region28: #{gmvsae_forward.7} parent=0 // pred_region
    _
  $region29: #{gmvsae_forward.7} parent=0 // pred_fallthru
    _
  // Predicated region
  $region30: #{gmvsae_forward.7} parent=0 // pred_check
    _
  $region31: #{gmvsae_forward.7} parent=0 // pred_check_branch
    %1092 = sbr.rel (0) target = $region33
  $region32: #{gmvsae_forward.7} parent=0 // pred_region
    _
  $region33: #{gmvsae_forward.7} parent=0 // pred_fallthru
    _

</llo_original>
